<compile_context>
chip_gen: v6e
topology: v6e:2x2x1
jax: 0.10.0
libtpu: 0.0.40
codegen_flags: <defaults>
</compile_context>

<pallas_src>
import math

import jax
import jax.numpy as jnp
from jax import lax
from jax.experimental import pallas as pl
from jax.experimental.pallas import tpu as pltpu


def _round_up(x, m):
    return (x + m - 1) // m * m


def _attention_kernel(q_ref, k_ref, v_ref,
                      wq_ref, wk_ref, wv_ref,
                      bq_ref, bk_ref, bv_ref,
                      bias_ref, o_ref,
                      kproj_ref, vproj_ref):
    # grid = (batch, s_tiles); s is the inner "arbitrary" axis.
    # Hoisted K/V projection: computed once per batch (s == 0) into VMEM
    # scratch, reused by every S-tile of that batch.
    @pl.when(pl.program_id(1) == 0)
    def _project_kv():
        K = jnp.dot(k_ref[0], wk_ref[...],
                    preferred_element_type=jnp.float32) + bk_ref[...]
        V = jnp.dot(v_ref[0], wv_ref[...],
                    preferred_element_type=jnp.float32) + bv_ref[...]
        kproj_ref[...] = K.astype(kproj_ref.dtype)
        vproj_ref[...] = V.astype(vproj_ref.dtype)

    cdt = kproj_ref.dtype   # narrow MXU operand dtype (bf16 by default)

    # Q projection for this S-tile; the 1/sqrt(D) scale is already folded into
    # wq / bq host-side, so no per-element rescale of the scores is needed.
    Q = jnp.dot(q_ref[0], wq_ref[...],
                preferred_element_type=jnp.float32) + bq_ref[...]

    # scores = Q K^T (contract last axes; no materialized transpose).
    scores = lax.dot_general(
        Q.astype(cdt), kproj_ref[...],
        dimension_numbers=(((1,), (1,)), ((), ())),
        preferred_element_type=jnp.float32)
    scores = scores + bias_ref[...]   # additive mask + T-padding mask

    # Numerically stable softmax; denominator via the EUP approx reciprocal.
    m = jnp.max(scores, axis=-1, keepdims=True)
    p = jnp.exp(scores - m)
    p = p * pl.reciprocal(jnp.sum(p, axis=-1, keepdims=True), approx=True)

    # TODO(synk): training-mode dropout (p=0.1) not applied; eval-mode dropout
    # is the identity, which is what this kernel reproduces.

    out = jnp.dot(p.astype(cdt), vproj_ref[...],
                  preferred_element_type=jnp.float32)
    o_ref[0] = out.astype(o_ref.dtype)


def attention_layer(query, key, value, params, attn_mask=None,
                    compute_dtype=jnp.bfloat16):
    """Pallas implementation of AttentionLayer.forward (eval mode).

    query: (N, S, D); key/value: (N, T, D); attn_mask broadcastable to (S, T)
    or None.  params: wq/wk/wv in torch (out, in) layout, bq/bk/bv of shape (D,).
    compute_dtype: dtype of the MXU operands (accumulation is always f32).
    """
    N, S, D = query.shape
    _, T, _ = value.shape
    assert key.shape == value.shape
    out_dtype = query.dtype

    # Lane-dense feature and key dims (multiples of 128) and sublane-aligned S
    # tiles; TS capped at 256 to match the 256-wide MXU on v6e/v7x.
    Dp = _round_up(D, 128)
    Tp = _round_up(T, 128)
    TS = min(_round_up(S, 8), 256)
    Sp = _round_up(S, TS)
    n_s_tiles = Sp // TS

    scale = 1.0 / math.sqrt(D)

    # One-time host-side weight prep: transpose to (in, out), zero-pad to
    # (Dp, Dp), fold the score scale into wq/bq, cast to the narrow MXU dtype.
    def prep_w(w, s=1.0):
        wt = jnp.zeros((Dp, Dp), jnp.float32).at[:D, :D].set(
            w.T.astype(jnp.float32) * s)
        return wt.astype(compute_dtype)

    def prep_b(b, s=1.0):
        return jnp.zeros((1, Dp), jnp.float32).at[0, :D].set(
            b.astype(jnp.float32) * s)

    wq = prep_w(params["wq"], scale)
    wk = prep_w(params["wk"])
    wv = prep_w(params["wv"])
    bq = prep_b(params["bq"], scale)
    bk = prep_b(params["bk"])
    bv = prep_b(params["bv"])

    def prep_x(x, rows, rows_p):
        out = jnp.zeros((N, rows_p, Dp), compute_dtype)
        return out.at[:, :rows, :D].set(x.astype(compute_dtype))

    q_p = prep_x(query, S, Sp)
    k_p = prep_x(key, T, Tp)
    v_p = prep_x(value, T, Tp)

    # Batch-invariant additive bias (Sp, Tp): 0 on valid key columns, a very
    # large negative on padded key columns (so padded keys get zero softmax
    # weight), plus the user's additive mask on the valid (S, T) block.
    col_ids = lax.broadcasted_iota(jnp.int32, (Sp, Tp), 1)
    bias = jnp.where(col_ids < T, 0.0, -1e30).astype(jnp.float32)
    if attn_mask is not None:
        m2 = jnp.broadcast_to(attn_mask.astype(jnp.float32), (S, T))
        bias = bias.at[:S, :T].add((-1e10) * (1.0 - m2))
    # TODO(synk): per-batch (N, S, T) masks would need a batch-indexed mask spec.

    # Explicit VMEM budget from the actual footprint (double-buffered pipeline
    # blocks + projected-K/V scratch), with headroom for f32 temporaries;
    # capped at 64 MiB so the limit is valid on v7x as well as v5e/v6e.
    c_it = jnp.dtype(compute_dtype).itemsize
    o_it = jnp.dtype(out_dtype).itemsize
    est = (2 * TS * Dp * c_it            # q tile (double-buffered)
           + 2 * 2 * Tp * Dp * c_it      # k, v full-T blocks
           + 2 * 3 * Dp * Dp * c_it      # weights
           + 2 * 3 * Dp * 4              # projection biases (f32)
           + 2 * TS * Tp * 4             # mask-bias tile (f32)
           + 2 * TS * Dp * o_it          # output tile
           + 2 * Tp * Dp * c_it)         # projected K/V scratch
    vmem_limit = int(min(64 * 1024 * 1024, max(32 * 1024 * 1024, 3 * est)))

    out = pl.pallas_call(
        _attention_kernel,
        out_shape=jax.ShapeDtypeStruct((N, Sp, Dp), out_dtype),
        grid_spec=pltpu.PrefetchScalarGridSpec(
            num_scalar_prefetch=0,
            grid=(N, n_s_tiles),
            in_specs=[
                pl.BlockSpec((1, TS, Dp), lambda n, s: (n, s, 0)),   # q tile
                pl.BlockSpec((1, Tp, Dp), lambda n, s: (n, 0, 0)),   # k (per batch)
                pl.BlockSpec((1, Tp, Dp), lambda n, s: (n, 0, 0)),   # v (per batch)
                pl.BlockSpec((Dp, Dp), lambda n, s: (0, 0)),         # wq (resident)
                pl.BlockSpec((Dp, Dp), lambda n, s: (0, 0)),         # wk (resident)
                pl.BlockSpec((Dp, Dp), lambda n, s: (0, 0)),         # wv (resident)
                pl.BlockSpec((1, Dp), lambda n, s: (0, 0)),          # bq
                pl.BlockSpec((1, Dp), lambda n, s: (0, 0)),          # bk
                pl.BlockSpec((1, Dp), lambda n, s: (0, 0)),          # bv
                pl.BlockSpec((TS, Tp), lambda n, s: (s, 0)),         # mask bias
            ],
            out_specs=pl.BlockSpec((1, TS, Dp), lambda n, s: (n, s, 0)),
            scratch_shapes=[pltpu.VMEM((Tp, Dp), compute_dtype),     # projected K
                            pltpu.VMEM((Tp, Dp), compute_dtype)],    # projected V
        ),
        compiler_params=pltpu.CompilerParams(
            dimension_semantics=("parallel", "arbitrary"),
            vmem_limit_bytes=vmem_limit),
    )(q_p, k_p, v_p, wq, wk, wv, bq, bk, bv, bias)

    return out[:, :S, :D]


def _reference(query, key, value, params, attn_mask=None):
    """Plain-JAX reference mirroring the PyTorch forward (eval mode, f32)."""
    D = query.shape[-1]
    Q = query @ params["wq"].T + params["bq"]
    K = key @ params["wk"].T + params["bk"]
    V = value @ params["wv"].T + params["bv"]
    scores = jnp.einsum("nsd,ntd->nst", Q, K) / math.sqrt(D)
    if attn_mask is not None:
        scores = scores + (-1e10) * (1.0 - attn_mask)
    y = jax.nn.softmax(scores, axis=-1)
    return jnp.einsum("nst,ntd->nsd", y, V)


if __name__ == "__main__":
    # NOTE: at these tiny shapes the kernel is padding/overhead-dominated
    # (Dp padded 32->128); they exist only to validate correctness.
    N, S, T, D = 2, 8, 8, 32   # batch=2, seq=8, embed_dim=32

    key0 = jax.random.PRNGKey(0)
    ks = jax.random.split(key0, 10)

    # Deterministic parameter init (synthetic; shapes match nn.Linear(D, D)).
    scale = 1.0 / math.sqrt(D)
    params = {
        "wq": jax.random.uniform(ks[0], (D, D), jnp.float32, -scale, scale),
        "wk": jax.random.uniform(ks[1], (D, D), jnp.float32, -scale, scale),
        "wv": jax.random.uniform(ks[2], (D, D), jnp.float32, -scale, scale),
        "bq": jax.random.uniform(ks[3], (D,), jnp.float32, -scale, scale),
        "bk": jax.random.uniform(ks[4], (D,), jnp.float32, -scale, scale),
        "bv": jax.random.uniform(ks[5], (D,), jnp.float32, -scale, scale),
    }

    query = jax.random.normal(ks[6], (N, S, D), jnp.float32)
    key_in = jax.random.normal(ks[7], (N, T, D), jnp.float32)
    value = jax.random.normal(ks[8], (N, T, D), jnp.float32)

    # Causal mask (S, T) to exercise the masking path.
    attn_mask = jnp.tril(jnp.ones((S, T), jnp.float32))

    ref = _reference(query, key_in, value, params, attn_mask)

    # Strict check with f32 MXU operands (tolerance bounded by the EUP
    # approximate-reciprocal softmax denominator).
    out_f32 = attention_layer(query, key_in, value, params, attn_mask,
                              compute_dtype=jnp.float32)
    out_f32 = jax.block_until_ready(out_f32)
    assert out_f32.shape == (N, S, D)
    assert jnp.allclose(out_f32, ref, atol=5e-3, rtol=5e-3), "f32 mismatch"

    # Performance path: bf16 MXU operands (f32 accumulation / softmax math),
    # checked against the f32 reference with a bf16-appropriate tolerance.
    out_bf16 = attention_layer(query, key_in, value, params, attn_mask,
                               compute_dtype=jnp.bfloat16)
    out_bf16 = jax.block_until_ready(out_bf16)
    assert out_bf16.shape == (N, S, D)
    assert jnp.allclose(out_bf16, ref, atol=3e-2, rtol=3e-2), "bf16 mismatch"

    print("KERNEL_OK")
</pallas_src>

<mosaic_0001>
module attributes {stable_mosaic.version = 11 : i64} {
  func.func @_attention_kernel(%arg0: i32, %arg1: i32, %arg2: memref<1x8x128xf32, #tpu.memory_space<vmem>>, %arg3: memref<1x128x128xf32, #tpu.memory_space<vmem>>, %arg4: memref<1x128x128xf32, #tpu.memory_space<vmem>>, %arg5: memref<128x128xf32, #tpu.memory_space<vmem>>, %arg6: memref<128x128xf32, #tpu.memory_space<vmem>>, %arg7: memref<128x128xf32, #tpu.memory_space<vmem>>, %arg8: memref<1x128xf32, #tpu.memory_space<vmem>>, %arg9: memref<1x128xf32, #tpu.memory_space<vmem>>, %arg10: memref<1x128xf32, #tpu.memory_space<vmem>>, %arg11: memref<8x128xf32, #tpu.memory_space<vmem>>, %arg12: memref<1x8x128xf32, #tpu.memory_space<vmem>>, %arg13: memref<128x128xf32, #tpu.memory_space<vmem>>, %arg14: memref<128x128xf32, #tpu.memory_space<vmem>>) attributes {dimension_semantics = [#tpu.dimension_semantics<parallel>, #tpu.dimension_semantics<arbitrary>], iteration_bounds = array<i64: 2, 1>, scalar_prefetch = 0 : i64, scratch_operands = 2 : i64, tpu.core_type = #tpu.core_type<tc>, window_params = [{transform_indices = @transform_0, window_bounds = array<i64: 1, 8, 128>}, {transform_indices = @transform_1, window_bounds = array<i64: 1, 128, 128>}, {transform_indices = @transform_2, window_bounds = array<i64: 1, 128, 128>}, {pipeline_mode = #tpu.pipeline_mode<synchronous>, transform_indices = @transform_3, window_bounds = array<i64: 128, 128>}, {pipeline_mode = #tpu.pipeline_mode<synchronous>, transform_indices = @transform_4, window_bounds = array<i64: 128, 128>}, {pipeline_mode = #tpu.pipeline_mode<synchronous>, transform_indices = @transform_5, window_bounds = array<i64: 128, 128>}, {pipeline_mode = #tpu.pipeline_mode<synchronous>, transform_indices = @transform_6, window_bounds = array<i64: 1, 128>}, {pipeline_mode = #tpu.pipeline_mode<synchronous>, transform_indices = @transform_7, window_bounds = array<i64: 1, 128>}, {pipeline_mode = #tpu.pipeline_mode<synchronous>, transform_indices = @transform_8, window_bounds = array<i64: 1, 128>}, {transform_indices = @transform_9, window_bounds = array<i64: 8, 128>}, {transform_indices = @transform_10, window_bounds = array<i64: 1, 8, 128>}]} {
    %c0_i32 = arith.constant 0 : i32
    %0 = arith.cmpi eq, %arg1, %c0_i32 : i32
    %1 = arith.extui %0 : i1 to i32
    %c0_i32_0 = arith.constant 0 : i32
    %2 = arith.cmpi ne, %1, %c0_i32_0 : i32
    scf.if %2 {
      %c0_20 = arith.constant 0 : index
      %c0_21 = arith.constant 0 : index
      %c0_22 = arith.constant 0 : index
      %29 = vector.load %arg3[%c0_20, %c0_21, %c0_22] : memref<1x128x128xf32, #tpu.memory_space<vmem>>, vector<1x128x128xf32>
      %30 = vector.shape_cast %29 : vector<1x128x128xf32> to vector<128x128xf32>
      %c0_23 = arith.constant 0 : index
      %c0_24 = arith.constant 0 : index
      %31 = vector.load %arg6[%c0_23, %c0_24] : memref<128x128xf32, #tpu.memory_space<vmem>>, vector<128x128xf32>
      %cst_25 = arith.constant dense<0.000000e+00> : vector<128x128xf32>
      %32 = tpu.matmul %30, %31, %cst_25 {dimension_numbers = #tpu.dot_dimension_numbers<[1], [0], [0], [1], [0, 0, 1, 1], [], []>} : vector<128x128xf32>, vector<128x128xf32>, vector<128x128xf32> -> vector<128x128xf32>
      %c0_26 = arith.constant 0 : index
      %c0_27 = arith.constant 0 : index
      %33 = vector.load %arg9[%c0_26, %c0_27] : memref<1x128xf32, #tpu.memory_space<vmem>>, vector<1x128xf32>
      %34 = vector.broadcast %33 : vector<1x128xf32> to vector<128x128xf32>
      %35 = arith.addf %32, %34 : vector<128x128xf32>
      %c0_28 = arith.constant 0 : index
      %c0_29 = arith.constant 0 : index
      %c0_30 = arith.constant 0 : index
      %36 = vector.load %arg4[%c0_28, %c0_29, %c0_30] : memref<1x128x128xf32, #tpu.memory_space<vmem>>, vector<1x128x128xf32>
      %37 = vector.shape_cast %36 : vector<1x128x128xf32> to vector<128x128xf32>
      %c0_31 = arith.constant 0 : index
      %c0_32 = arith.constant 0 : index
      %38 = vector.load %arg7[%c0_31, %c0_32] : memref<128x128xf32, #tpu.memory_space<vmem>>, vector<128x128xf32>
      %cst_33 = arith.constant dense<0.000000e+00> : vector<128x128xf32>
      %39 = tpu.matmul %37, %38, %cst_33 {dimension_numbers = #tpu.dot_dimension_numbers<[1], [0], [0], [1], [0, 0, 1, 1], [], []>} : vector<128x128xf32>, vector<128x128xf32>, vector<128x128xf32> -> vector<128x128xf32>
      %c0_34 = arith.constant 0 : index
      %c0_35 = arith.constant 0 : index
      %40 = vector.load %arg10[%c0_34, %c0_35] : memref<1x128xf32, #tpu.memory_space<vmem>>, vector<1x128xf32>
      %41 = vector.broadcast %40 : vector<1x128xf32> to vector<128x128xf32>
      %42 = arith.addf %39, %41 : vector<128x128xf32>
      %c0_36 = arith.constant 0 : index
      %c0_37 = arith.constant 0 : index
      %43 = vector.load %arg13[%c0_36, %c0_37] : memref<128x128xf32, #tpu.memory_space<vmem>>, vector<128x128xf32>
      tpu.vector_store %arg13[%c0_36, %c0_37], %35 {strides = array<i32>} : memref<128x128xf32, #tpu.memory_space<vmem>>, vector<128x128xf32>,
      %c0_38 = arith.constant 0 : index
      %c0_39 = arith.constant 0 : index
      %44 = vector.load %arg14[%c0_38, %c0_39] : memref<128x128xf32, #tpu.memory_space<vmem>>, vector<128x128xf32>
      tpu.vector_store %arg14[%c0_38, %c0_39], %42 {strides = array<i32>} : memref<128x128xf32, #tpu.memory_space<vmem>>, vector<128x128xf32>,
    } else {
    }
    %c0 = arith.constant 0 : index
    %c0_1 = arith.constant 0 : index
    %c0_2 = arith.constant 0 : index
    %3 = vector.load %arg2[%c0, %c0_1, %c0_2] : memref<1x8x128xf32, #tpu.memory_space<vmem>>, vector<1x8x128xf32>
    %4 = vector.shape_cast %3 : vector<1x8x128xf32> to vector<8x128xf32>
    %c0_3 = arith.constant 0 : index
    %c0_4 = arith.constant 0 : index
    %5 = vector.load %arg5[%c0_3, %c0_4] : memref<128x128xf32, #tpu.memory_space<vmem>>, vector<128x128xf32>
    %cst = arith.constant dense<0.000000e+00> : vector<8x128xf32>
    %6 = tpu.matmul %4, %5, %cst {dimension_numbers = #tpu.dot_dimension_numbers<[1], [0], [0], [1], [0, 0, 1, 1], [], []>} : vector<8x128xf32>, vector<128x128xf32>, vector<8x128xf32> -> vector<8x128xf32>
    %c0_5 = arith.constant 0 : index
    %c0_6 = arith.constant 0 : index
    %7 = vector.load %arg8[%c0_5, %c0_6] : memref<1x128xf32, #tpu.memory_space<vmem>>, vector<1x128xf32>
    %8 = vector.broadcast %7 : vector<1x128xf32> to vector<8x128xf32>
    %9 = arith.addf %6, %8 : vector<8x128xf32>
    %c0_7 = arith.constant 0 : index
    %c0_8 = arith.constant 0 : index
    %10 = vector.load %arg13[%c0_7, %c0_8] : memref<128x128xf32, #tpu.memory_space<vmem>>, vector<128x128xf32>
    %cst_9 = arith.constant dense<0.000000e+00> : vector<8x128xf32>
    %11 = tpu.matmul %9, %10, %cst_9 {dimension_numbers = #tpu.dot_dimension_numbers<[1], [1], [0], [0], [0, 0, 1, 0], [], []>} : vector<8x128xf32>, vector<128x128xf32>, vector<8x128xf32> -> vector<8x128xf32>
    %c0_10 = arith.constant 0 : index
    %c0_11 = arith.constant 0 : index
    %12 = vector.load %arg11[%c0_10, %c0_11] : memref<8x128xf32, #tpu.memory_space<vmem>>, vector<8x128xf32>
    %13 = arith.addf %11, %12 : vector<8x128xf32>
    %cst_12 = arith.constant dense<0xFF800000> : vector<8xf32>
    %14 = vector.multi_reduction <maximumf>, %13, %cst_12 [1] : vector<8x128xf32> to vector<8xf32>
    %15 = vector.shape_cast %14 : vector<8xf32> to vector<8x1xf32>
    %16 = vector.broadcast %15 : vector<8x1xf32> to vector<8x128xf32>
    %17 = arith.subf %13, %16 : vector<8x128xf32>
    %18 = math.exp %17 : vector<8x128xf32>
    %cst_13 = arith.constant dense<0.000000e+00> : vector<8xf32>
    %19 = vector.multi_reduction <add>, %18, %cst_13 [1] : vector<8x128xf32> to vector<8xf32>
    %20 = vector.shape_cast %19 : vector<8xf32> to vector<8x1xf32>
    %21 = tpu.reciprocal %20 {approx = true} : vector<8x1xf32> -> vector<8x1xf32>
    %22 = vector.broadcast %21 : vector<8x1xf32> to vector<8x128xf32>
    %23 = arith.mulf %18, %22 : vector<8x128xf32>
    %c0_14 = arith.constant 0 : index
    %c0_15 = arith.constant 0 : index
    %24 = vector.load %arg14[%c0_14, %c0_15] : memref<128x128xf32, #tpu.memory_space<vmem>>, vector<128x128xf32>
    %cst_16 = arith.constant dense<0.000000e+00> : vector<8x128xf32>
    %25 = tpu.matmul %23, %24, %cst_16 {dimension_numbers = #tpu.dot_dimension_numbers<[1], [0], [0], [1], [0, 0, 1, 1], [], []>} : vector<8x128xf32>, vector<128x128xf32>, vector<8x128xf32> -> vector<8x128xf32>
    %c0_17 = arith.constant 0 : index
    %c0_18 = arith.constant 0 : index
    %c0_19 = arith.constant 0 : index
    %26 = vector.load %arg12[%c0_17, %c0_18, %c0_19] : memref<1x8x128xf32, #tpu.memory_space<vmem>>, vector<1x8x128xf32>
    %27 = vector.shape_cast %26 : vector<1x8x128xf32> to vector<8x128xf32>
    %28 = vector.shape_cast %25 : vector<8x128xf32> to vector<1x8x128xf32>
    tpu.vector_store %arg12[%c0_17, %c0_18, %c0_19], %28 {strides = array<i32>} : memref<1x8x128xf32, #tpu.memory_space<vmem>>, vector<1x8x128xf32>,
    return
  }
  func.func @transform_0(%arg0: i32, %arg1: i32) -> (i32, i32, i32) {
    %c0_i32 = arith.constant 0 : i32
    %c0_i32_0 = arith.constant 0 : i32
    return %arg0, %arg1, %c0_i32 : i32, i32, i32
  }
  func.func @transform_1(%arg0: i32, %arg1: i32) -> (i32, i32, i32) {
    %c0_i32 = arith.constant 0 : i32
    %c0_i32_0 = arith.constant 0 : i32
    %c0_i32_1 = arith.constant 0 : i32
    return %arg0, %c0_i32, %c0_i32_0 : i32, i32, i32
  }
  func.func @transform_2(%arg0: i32, %arg1: i32) -> (i32, i32, i32) {
    %c0_i32 = arith.constant 0 : i32
    %c0_i32_0 = arith.constant 0 : i32
    %c0_i32_1 = arith.constant 0 : i32
    return %arg0, %c0_i32, %c0_i32_0 : i32, i32, i32
  }
  func.func @transform_3(%arg0: i32, %arg1: i32) -> (i32, i32) {
    %c0_i32 = arith.constant 0 : i32
    %c0_i32_0 = arith.constant 0 : i32
    %c0_i32_1 = arith.constant 0 : i32
    return %c0_i32, %c0_i32_0 : i32, i32
  }
  func.func @transform_4(%arg0: i32, %arg1: i32) -> (i32, i32) {
    %c0_i32 = arith.constant 0 : i32
    %c0_i32_0 = arith.constant 0 : i32
    %c0_i32_1 = arith.constant 0 : i32
    return %c0_i32, %c0_i32_0 : i32, i32
  }
  func.func @transform_5(%arg0: i32, %arg1: i32) -> (i32, i32) {
    %c0_i32 = arith.constant 0 : i32
    %c0_i32_0 = arith.constant 0 : i32
    %c0_i32_1 = arith.constant 0 : i32
    return %c0_i32, %c0_i32_0 : i32, i32
  }
  func.func @transform_6(%arg0: i32, %arg1: i32) -> (i32, i32) {
    %c0_i32 = arith.constant 0 : i32
    %c0_i32_0 = arith.constant 0 : i32
    %c0_i32_1 = arith.constant 0 : i32
    return %c0_i32, %c0_i32_0 : i32, i32
  }
  func.func @transform_7(%arg0: i32, %arg1: i32) -> (i32, i32) {
    %c0_i32 = arith.constant 0 : i32
    %c0_i32_0 = arith.constant 0 : i32
    %c0_i32_1 = arith.constant 0 : i32
    return %c0_i32, %c0_i32_0 : i32, i32
  }
  func.func @transform_8(%arg0: i32, %arg1: i32) -> (i32, i32) {
    %c0_i32 = arith.constant 0 : i32
    %c0_i32_0 = arith.constant 0 : i32
    %c0_i32_1 = arith.constant 0 : i32
    return %c0_i32, %c0_i32_0 : i32, i32
  }
  func.func @transform_9(%arg0: i32, %arg1: i32) -> (i32, i32) {
    %c0_i32 = arith.constant 0 : i32
    %c0_i32_0 = arith.constant 0 : i32
    return %arg1, %c0_i32 : i32, i32
  }
  func.func @transform_10(%arg0: i32, %arg1: i32) -> (i32, i32, i32) {
    %c0_i32 = arith.constant 0 : i32
    %c0_i32_0 = arith.constant 0 : i32
    return %arg0, %arg1, %c0_i32 : i32, i32, i32
  }
}

</mosaic_0001>

<llo_original>
// kernel: tpu_custom_call.1
$region0: #{tpu_custom_call.1}
  #allocation0 [shape = 'u32[]', space=smem, size = 0x4, offset = 0x4, fixed_abs, tag = 'smem constant byte address 0x4 - core index']
  #allocation1 [shape = 'u32[144,128]{1,0:T(1,128)}', space=vmem, size = 0x12000, scoped, tag = 'internal scratch']
  #allocation2 [shape = 'f32[128,128]{1,0:T(8,128)}', space=vmem, size = 0x10000, scoped, tag = 'scratch operand']
  #allocation3 [shape = 'f32[128,128]{1,0:T(8,128)}', space=vmem, size = 0x10000, scoped, tag = 'scratch operand']
  %s0 = inlined_call_operand.hbm [shape: f32[2,8,128], index: 0, kind: input, shape index: {}]
  %s1 = inlined_call_operand.hbm [shape: f32[2,128,128], index: 1, kind: input, shape index: {}]
  %s2 = inlined_call_operand.hbm [shape: f32[2,128,128], index: 2, kind: input, shape index: {}]
  %s3 = inlined_call_operand.hbm [shape: f32[128,128], index: 3, kind: input, shape index: {}]
  %s4 = inlined_call_operand.hbm [shape: f32[128,128], index: 4, kind: input, shape index: {}]
  %s5 = inlined_call_operand.hbm [shape: f32[128,128], index: 5, kind: input, shape index: {}]
  %s6 = inlined_call_operand.vmem [shape: f32[1,128], index: 6, kind: input, shape index: {}]
  %s7 = inlined_call_operand.vmem [shape: f32[1,128], index: 7, kind: input, shape index: {}]
  %s8 = inlined_call_operand.vmem [shape: f32[1,128], index: 8, kind: input, shape index: {}]
  %s9 = inlined_call_operand.vmem [shape: f32[8,128], index: 9, kind: input, shape index: {}]
  %s10 = inlined_call_operand.hbm [shape: f32[2,8,128], index: 10, kind: output, shape index: {}]
  %s11 = sld [smem:[#allocation0]]
  $region101: #{tpu_custom_call.1} parent=0
    _
  %s13 = ssub.s32 1, %s11
  %s14 = scalar_select 0, %s13, %s11
  $region1: #{tpu_custom_call.1} parent=0
    #allocation4 [shape = 'u8[8192]{0}', space=vmem, size = 0x2000, scoped, tag = 'input window, operand 0']
    #allocation5 [shape = 's32[2]{0}', space=sflag, size = 0x8, scoped, tag = 'scoped memory for tpu_custom_call.1']
    #allocation6 [shape = 's32[2]{0}', space=sflag, size = 0x8, scoped, tag = 'scoped memory for tpu_custom_call.1']
    #allocation7 [shape = 'u8[131072]{0}', space=vmem, size = 0x20000, scoped, tag = 'input window, operand 1']
    #allocation8 [shape = 's32[2]{0}', space=sflag, size = 0x8, scoped, tag = 'scoped memory for tpu_custom_call.1']
    #allocation9 [shape = 'u8[131072]{0}', space=vmem, size = 0x20000, scoped, tag = 'input window, operand 2']
    #allocation10 [shape = 'u8[65536]{0}', space=vmem, size = 0x10000, scoped, tag = 'input window, operand 3, single buffered']
    #allocation11 [shape = 's32[1]{0}', space=sflag, size = 0x4, scoped, tag = 'scoped memory for tpu_custom_call.1']
    #allocation12 [shape = 'u8[65536]{0}', space=vmem, size = 0x10000, scoped, tag = 'input window, operand 4, single buffered']
    #allocation13 [shape = 'u8[65536]{0}', space=vmem, size = 0x10000, scoped, tag = 'input window, operand 5, single buffered']
    #allocation14 [shape = 's32[1]{0}', space=sflag, size = 0x4, scoped, tag = 'scoped memory for tpu_custom_call.1']
    #allocation15 [shape = 'u8[8192]{0}', space=vmem, size = 0x2000, scoped, tag = 'output window, operand 0']
    %15 = vsyncpa [#allocation5], 0
    %s16 = scalar_lea.sflag [#allocation5], 1
    %17 = vsyncpa %s16, 0
    %18 = vsyncpa [#allocation8], 0
    %s19 = scalar_lea.sflag [#allocation8], 1
    %20 = vsyncpa %s19, 0
    %21 = vsyncpa [#allocation11], 0
    %22 = vsyncpa [#allocation14], 0
    %23 = vsyncpa [#allocation6], 0
    %s24 = scalar_lea.sflag [#allocation6], 1
    %25 = vsyncpa %s24, 0
    loop: start=0, step=1, limit=4
    $region2: #{tpu_custom_call.1} parent=1 // loop_pre_header
      _
    $region3: #{tpu_custom_call.1} parent=1 // loop_header
      %s27 = sphi 0, %s31
      %p28 = scmp.ge.s32.totalorder %s27, 4
      %s34 = sphi 0, %s46
      %s35 = sphi 0, %s42
      %s36 = sphi 0, %s34
      %s37 = sphi 0, %s35
      %s38 = sphi 0, %s36
      %s39 = sphi 0, %s37
      %s51 = sphi 0, %s53
      %s54 = sphi 0, %s51
      %s55 = sphi 0, %s54
      %s71 = sphi 0, %s55
      %s77 = sphi 0, %s79
      %s80 = sphi 0, %s77
      %s81 = sphi 0, %s80
      %s97 = sphi 0, %s81
      %s103 = sphi 0, %s105
      %s106 = sphi 0, %s103
      %s107 = sphi 0, %s106
      %s123 = sphi 0, %s107
      %s127 = sphi 0, %s127
      %s129 = sphi 0, %s127
      %s130 = sphi 0, %s129
      %s144 = sphi 0, %s130
      %s148 = sphi 0, %s148
      %s150 = sphi 0, %s148
      %s151 = sphi 0, %s150
      %s165 = sphi 0, %s151
      %s169 = sphi 0, %s169
      %s171 = sphi 0, %s169
      %s172 = sphi 0, %s171
      %s186 = sphi 0, %s172
      %s190 = sphi 0, %s190
      %s192 = sphi 0, %s190
      %s193 = sphi 0, %s192
      %s207 = sphi 0, %s193
      %s211 = sphi 0, %s211
      %s213 = sphi 0, %s211
      %s214 = sphi 0, %s213
      %s228 = sphi 0, %s214
      %s232 = sphi 0, %s232
      %s234 = sphi 0, %s232
      %s235 = sphi 0, %s234
      %s249 = sphi 0, %s235
      %s255 = sphi 0, %s257
      %s258 = sphi 0, %s255
      %s259 = sphi 0, %s258
      %s275 = sphi 0, %s259
      %s283 = sphi 0, %s285
      %s286 = sphi 0, %s283
      %s287 = sphi 0, %s286
      %s303 = sphi 0, %s287
    $region4: #{tpu_custom_call.1} parent=1 // loop_header_branch
      %30 = sbr.rel (%p28) target = $region8
    $region5: #{tpu_custom_call.1} parent=1 // loop_body
      %s32 = ssub.s32 %s27, 1
      %s33 = ssub.s32 %s27, 2
      %s40 = sadd.s32 1, %s35
      %p41 = scmp.ge.s32.totalorder %s40, 1
      %s42 = scalar_select %p41, 0, %s40
      %s43 = sadd.s32 1, %s34
      %s44 = scalar_select %p41, %s43, %s34
      %p45 = scmp.ge.s32.totalorder %s44, 2
      %s46 = scalar_select %p45, 0, %s44
      %s47 = ssub.s32 %s34, %s46
      %s48 = ssub.s32 %s35, %s42
      %s49 = sor.u32 %s47, %s48
      %p50 = scmp.eq.s32.totalorder %s49, 0
      %s52 = sadd.s32 %s51, 1
      %s53 = scalar_select %p50, %s51, %s52
      %p56 = pneg %p50
      %p57 = scmp.eq.s32.totalorder %s27, 1
      %p58 = por %p56, %p57
      %p59 = scmp.ne.s32.totalorder %s51, %s54
      %p60 = scmp.eq.s32.totalorder %s27, 0
      %p61 = por %p59, %p60
      %p62 = scmp.ne.s32.totalorder %s51, %s54
      %p63 = scmp.eq.s32.totalorder %s32, 1
      %p64 = por %p62, %p63
      %p65 = scmp.ne.s32.totalorder %s54, %s55
      %p66 = scmp.eq.s32.totalorder %s32, 0
      %p67 = por %p65, %p66
      %p68 = scmp.ne.s32.totalorder %s54, %s55
      %p69 = scmp.eq.s32.totalorder %s33, 1
      %p70 = por %p68, %p69
      %p72 = scmp.ne.s32.totalorder %s55, %s71
      %p73 = scmp.eq.s32.totalorder %s33, 0
      %p74 = por %p72, %p73
      %s75 = ssub.s32 %s34, %s46
      %p76 = scmp.eq.s32.totalorder %s75, 0
      %s78 = sadd.s32 %s77, 1
      %s79 = scalar_select %p76, %s77, %s78
      %p82 = pneg %p76
      %p83 = scmp.eq.s32.totalorder %s27, 1
      %p84 = por %p82, %p83
      %p85 = scmp.ne.s32.totalorder %s77, %s80
      %p86 = scmp.eq.s32.totalorder %s27, 0
      %p87 = por %p85, %p86
      %p88 = scmp.ne.s32.totalorder %s77, %s80
      %p89 = scmp.eq.s32.totalorder %s32, 1
      %p90 = por %p88, %p89
      %p91 = scmp.ne.s32.totalorder %s80, %s81
      %p92 = scmp.eq.s32.totalorder %s32, 0
      %p93 = por %p91, %p92
      %p94 = scmp.ne.s32.totalorder %s80, %s81
      %p95 = scmp.eq.s32.totalorder %s33, 1
      %p96 = por %p94, %p95
      %p98 = scmp.ne.s32.totalorder %s81, %s97
      %p99 = scmp.eq.s32.totalorder %s33, 0
      %p100 = por %p98, %p99
      %s101 = ssub.s32 %s34, %s46
      %p102 = scmp.eq.s32.totalorder %s101, 0
      %s104 = sadd.s32 %s103, 1
      %s105 = scalar_select %p102, %s103, %s104
      %p108 = pneg %p102
      %p109 = scmp.eq.s32.totalorder %s27, 1
      %p110 = por %p108, %p109
      %p111 = scmp.ne.s32.totalorder %s103, %s106
      %p112 = scmp.eq.s32.totalorder %s27, 0
      %p113 = por %p111, %p112
      %p114 = scmp.ne.s32.totalorder %s103, %s106
      %p115 = scmp.eq.s32.totalorder %s32, 1
      %p116 = por %p114, %p115
      %p117 = scmp.ne.s32.totalorder %s106, %s107
      %p118 = scmp.eq.s32.totalorder %s32, 0
      %p119 = por %p117, %p118
      %p120 = scmp.ne.s32.totalorder %s106, %s107
      %p121 = scmp.eq.s32.totalorder %s33, 1
      %p122 = por %p120, %p121
      %p124 = scmp.ne.s32.totalorder %s107, %s123
      %p125 = scmp.eq.s32.totalorder %s33, 0
      %p126 = por %p124, %p125
      %s128 = sadd.s32 %s127, 1
      %p131 = scmp.eq.s32.totalorder %s27, 1
      %p132 = scmp.ne.s32.totalorder %s127, %s129
      %p133 = scmp.eq.s32.totalorder %s27, 0
      %p134 = por %p132, %p133
      %p135 = scmp.ne.s32.totalorder %s127, %s129
      %p136 = scmp.eq.s32.totalorder %s32, 1
      %p137 = por %p135, %p136
      %p138 = scmp.ne.s32.totalorder %s129, %s130
      %p139 = scmp.eq.s32.totalorder %s32, 0
      %p140 = por %p138, %p139
      %p141 = scmp.ne.s32.totalorder %s129, %s130
      %p142 = scmp.eq.s32.totalorder %s33, 1
      %p143 = por %p141, %p142
      %p145 = scmp.ne.s32.totalorder %s130, %s144
      %p146 = scmp.eq.s32.totalorder %s33, 0
      %p147 = por %p145, %p146
      %s149 = sadd.s32 %s148, 1
      %p152 = scmp.eq.s32.totalorder %s27, 1
      %p153 = scmp.ne.s32.totalorder %s148, %s150
      %p154 = scmp.eq.s32.totalorder %s27, 0
      %p155 = por %p153, %p154
      %p156 = scmp.ne.s32.totalorder %s148, %s150
      %p157 = scmp.eq.s32.totalorder %s32, 1
      %p158 = por %p156, %p157
      %p159 = scmp.ne.s32.totalorder %s150, %s151
      %p160 = scmp.eq.s32.totalorder %s32, 0
      %p161 = por %p159, %p160
      %p162 = scmp.ne.s32.totalorder %s150, %s151
      %p163 = scmp.eq.s32.totalorder %s33, 1
      %p164 = por %p162, %p163
      %p166 = scmp.ne.s32.totalorder %s151, %s165
      %p167 = scmp.eq.s32.totalorder %s33, 0
      %p168 = por %p166, %p167
      %s170 = sadd.s32 %s169, 1
      %p173 = scmp.eq.s32.totalorder %s27, 1
      %p174 = scmp.ne.s32.totalorder %s169, %s171
      %p175 = scmp.eq.s32.totalorder %s27, 0
      %p176 = por %p174, %p175
      %p177 = scmp.ne.s32.totalorder %s169, %s171
      %p178 = scmp.eq.s32.totalorder %s32, 1
      %p179 = por %p177, %p178
      %p180 = scmp.ne.s32.totalorder %s171, %s172
      %p181 = scmp.eq.s32.totalorder %s32, 0
      %p182 = por %p180, %p181
      %p183 = scmp.ne.s32.totalorder %s171, %s172
      %p184 = scmp.eq.s32.totalorder %s33, 1
      %p185 = por %p183, %p184
      %p187 = scmp.ne.s32.totalorder %s172, %s186
      %p188 = scmp.eq.s32.totalorder %s33, 0
      %p189 = por %p187, %p188
      %s191 = sadd.s32 %s190, 1
      %p194 = scmp.eq.s32.totalorder %s27, 1
      %p195 = scmp.ne.s32.totalorder %s190, %s192
      %p196 = scmp.eq.s32.totalorder %s27, 0
      %p197 = por %p195, %p196
      %p198 = scmp.ne.s32.totalorder %s190, %s192
      %p199 = scmp.eq.s32.totalorder %s32, 1
      %p200 = por %p198, %p199
      %p201 = scmp.ne.s32.totalorder %s192, %s193
      %p202 = scmp.eq.s32.totalorder %s32, 0
      %p203 = por %p201, %p202
      %p204 = scmp.ne.s32.totalorder %s192, %s193
      %p205 = scmp.eq.s32.totalorder %s33, 1
      %p206 = por %p204, %p205
      %p208 = scmp.ne.s32.totalorder %s193, %s207
      %p209 = scmp.eq.s32.totalorder %s33, 0
      %p210 = por %p208, %p209
      %s212 = sadd.s32 %s211, 1
      %p215 = scmp.eq.s32.totalorder %s27, 1
      %p216 = scmp.ne.s32.totalorder %s211, %s213
      %p217 = scmp.eq.s32.totalorder %s27, 0
      %p218 = por %p216, %p217
      %p219 = scmp.ne.s32.totalorder %s211, %s213
      %p220 = scmp.eq.s32.totalorder %s32, 1
      %p221 = por %p219, %p220
      %p222 = scmp.ne.s32.totalorder %s213, %s214
      %p223 = scmp.eq.s32.totalorder %s32, 0
      %p224 = por %p222, %p223
      %p225 = scmp.ne.s32.totalorder %s213, %s214
      %p226 = scmp.eq.s32.totalorder %s33, 1
      %p227 = por %p225, %p226
      %p229 = scmp.ne.s32.totalorder %s214, %s228
      %p230 = scmp.eq.s32.totalorder %s33, 0
      %p231 = por %p229, %p230
      %s233 = sadd.s32 %s232, 1
      %p236 = scmp.eq.s32.totalorder %s27, 1
      %p237 = scmp.ne.s32.totalorder %s232, %s234
      %p238 = scmp.eq.s32.totalorder %s27, 0
      %p239 = por %p237, %p238
      %p240 = scmp.ne.s32.totalorder %s232, %s234
      %p241 = scmp.eq.s32.totalorder %s32, 1
      %p242 = por %p240, %p241
      %p243 = scmp.ne.s32.totalorder %s234, %s235
      %p244 = scmp.eq.s32.totalorder %s32, 0
      %p245 = por %p243, %p244
      %p246 = scmp.ne.s32.totalorder %s234, %s235
      %p247 = scmp.eq.s32.totalorder %s33, 1
      %p248 = por %p246, %p247
      %p250 = scmp.ne.s32.totalorder %s235, %s249
      %p251 = scmp.eq.s32.totalorder %s33, 0
      %p252 = por %p250, %p251
      %s253 = ssub.s32 %s35, %s42
      %p254 = scmp.eq.s32.totalorder %s253, 0
      %s256 = sadd.s32 %s255, 1
      %s257 = scalar_select %p254, %s255, %s256
      %p260 = pneg %p254
      %p261 = scmp.eq.s32.totalorder %s27, 1
      %p262 = por %p260, %p261
      %p263 = scmp.ne.s32.totalorder %s255, %s258
      %p264 = scmp.eq.s32.totalorder %s27, 0
      %p265 = por %p263, %p264
      %p266 = scmp.ne.s32.totalorder %s255, %s258
      %p267 = scmp.eq.s32.totalorder %s32, 1
      %p268 = por %p266, %p267
      %p269 = scmp.ne.s32.totalorder %s258, %s259
      %p270 = scmp.eq.s32.totalorder %s32, 0
      %p271 = por %p269, %p270
      %p272 = scmp.ne.s32.totalorder %s258, %s259
      %p273 = scmp.eq.s32.totalorder %s33, 1
      %p274 = por %p272, %p273
      %p276 = scmp.ne.s32.totalorder %s259, %s275
      %p277 = scmp.eq.s32.totalorder %s33, 0
      %p278 = por %p276, %p277
      %s279 = ssub.s32 %s34, %s46
      %s280 = ssub.s32 %s35, %s42
      %s281 = sor.u32 %s279, %s280
      %p282 = scmp.eq.s32.totalorder %s281, 0
      %s284 = sadd.s32 %s283, 1
      %s285 = scalar_select %p282, %s283, %s284
      %p288 = pneg %p282
      %p289 = scmp.eq.s32.totalorder %s27, 1
      %p290 = por %p288, %p289
      %p291 = scmp.ne.s32.totalorder %s283, %s286
      %p292 = scmp.eq.s32.totalorder %s27, 0
      %p293 = por %p291, %p292
      %p294 = scmp.ne.s32.totalorder %s283, %s286
      %p295 = scmp.eq.s32.totalorder %s32, 1
      %p296 = por %p294, %p295
      %p297 = scmp.ne.s32.totalorder %s286, %s287
      %p298 = scmp.eq.s32.totalorder %s32, 0
      %p299 = por %p297, %p298
      %p300 = scmp.ne.s32.totalorder %s286, %s287
      %p301 = scmp.eq.s32.totalorder %s33, 1
      %p302 = por %p300, %p301
      %p304 = scmp.ne.s32.totalorder %s287, %s303
      %p305 = scmp.eq.s32.totalorder %s33, 0
      %p306 = por %p304, %p305
      %p307 = scmp.le.s32.totalorder 1, %s27
      %p308 = scmp.lt.s32.totalorder %s27, 3
      %p309 = pnand %p307, %p308
      %p310 = pneg %p309
      // Predicated region
      $region9: #{tpu_custom_call.1} parent=5 // pred_check
        _
      $region10: #{tpu_custom_call.1} parent=5 // pred_check_branch
        %312 = sbr.rel (%p309) target = $region12
      $region11: #{tpu_custom_call.1} parent=5 // pred_region
        %s313 = ssub.s32 %s27, 1
        // Predicated region
        $region13: #{tpu_custom_call.1} parent=11 // pred_check
          %p314 = pneg %p140
        $region14: #{tpu_custom_call.1} parent=11 // pred_check_branch
          %316 = sbr.rel (%p314) target = $region16
        $region15: #{tpu_custom_call.1} parent=11 // pred_region
          %s318 = ssub.s32 2048, 2048
          %319 = vsyncadd [#allocation11], %s318
          %s320 = sshll.u32 [#allocation10], 4
          %s321 = int_to_ptr.vmem [resolvable:$true] %s320
          %326 = dma.hbm_to_vmem [thread:$0]  %s3, 2048, %s321, [#allocation11], 128, 128, 8
        $region16: #{tpu_custom_call.1} parent=11 // pred_fallthru
          _
        // Predicated region
        $region17: #{tpu_custom_call.1} parent=11 // pred_check
          %p327 = pneg %p161
        $region18: #{tpu_custom_call.1} parent=11 // pred_check_branch
          %329 = sbr.rel (%p327) target = $region20
        $region19: #{tpu_custom_call.1} parent=11 // pred_region
          %s331 = ssub.s32 2048, 2048
          %332 = vsyncadd [#allocation11], %s331
          %s333 = sshll.u32 [#allocation12], 4
          %s334 = int_to_ptr.vmem [resolvable:$true] %s333
          %339 = dma.hbm_to_vmem [thread:$0]  %s4, 2048, %s334, [#allocation11], 128, 128, 8
        $region20: #{tpu_custom_call.1} parent=11 // pred_fallthru
          _
        // Predicated region
        $region21: #{tpu_custom_call.1} parent=11 // pred_check
          %p340 = pneg %p182
        $region22: #{tpu_custom_call.1} parent=11 // pred_check_branch
          %342 = sbr.rel (%p340) target = $region24
        $region23: #{tpu_custom_call.1} parent=11 // pred_region
          %s344 = ssub.s32 2048, 2048
          %345 = vsyncadd [#allocation14], %s344
          %s346 = sshll.u32 [#allocation13], 4
          %s347 = int_to_ptr.vmem [resolvable:$true] %s346
          %352 = dma.hbm_to_vmem [thread:$0]  %s5, 2048, %s347, [#allocation14], 128, 128, 8
        $region24: #{tpu_custom_call.1} parent=11 // pred_fallthru
          _
        // Predicated region
        $region25: #{tpu_custom_call.1} parent=11 // pred_check
          %p353 = pneg %p203
        $region26: #{tpu_custom_call.1} parent=11 // pred_check_branch
          %355 = sbr.rel (%p353) target = $region28
        $region27: #{tpu_custom_call.1} parent=11 // pred_region
          _
        $region28: #{tpu_custom_call.1} parent=11 // pred_fallthru
          _
        // Predicated region
        $region29: #{tpu_custom_call.1} parent=11 // pred_check
          %p356 = pneg %p224
        $region30: #{tpu_custom_call.1} parent=11 // pred_check_branch
          %358 = sbr.rel (%p356) target = $region32
        $region31: #{tpu_custom_call.1} parent=11 // pred_region
          _
        $region32: #{tpu_custom_call.1} parent=11 // pred_fallthru
          _
        // Predicated region
        $region33: #{tpu_custom_call.1} parent=11 // pred_check
          %p359 = pneg %p245
        $region34: #{tpu_custom_call.1} parent=11 // pred_check_branch
          %361 = sbr.rel (%p359) target = $region36
        $region35: #{tpu_custom_call.1} parent=11 // pred_region
          _
        $region36: #{tpu_custom_call.1} parent=11 // pred_fallthru
          _
        // Predicated region
        $region37: #{tpu_custom_call.1} parent=11 // pred_check
          %p362 = pneg %p271
        $region38: #{tpu_custom_call.1} parent=11 // pred_check_branch
          %364 = sbr.rel (%p362) target = $region40
        $region39: #{tpu_custom_call.1} parent=11 // pred_region
          %p365 = scmp.lt.s32.totalorder %s37, 0
          %s366 = scalar_select %p365, %s37, 0
          %s367 = smul.addr %s366, 8
          %s368 = scalar_lea.vmem %s9, %s367
        $region40: #{tpu_custom_call.1} parent=11 // pred_fallthru
          _
      $region12: #{tpu_custom_call.1} parent=5 // pred_fallthru
        _
      %p369 = scmp.lt.s32.totalorder %s27, 2
      // Predicated region
      $region41: #{tpu_custom_call.1} parent=5 // pred_check
        %p370 = pneg %p369
      $region42: #{tpu_custom_call.1} parent=5 // pred_check_branch
        %372 = sbr.rel (%p370) target = $region44
      $region43: #{tpu_custom_call.1} parent=5 // pred_region
        // Predicated region
        $region45: #{tpu_custom_call.1} parent=43 // pred_check
          %p373 = pneg %p61
        $region46: #{tpu_custom_call.1} parent=43 // pred_check_branch
          %375 = sbr.rel (%p373) target = $region48
        $region47: #{tpu_custom_call.1} parent=43 // pred_region
          %s376 = sand.u32 %s51, 1
          %s377 = scalar_lea.sflag [#allocation5], %s376
          %s378 = sand.u32 %s51, 1
          %s379 = smul.addr %s378, 8
          %s380 = scalar_lea.vmem [#allocation4], %s379
          %s382 = ssub.s32 128, 128
          %383 = vsyncadd %s377, %s382
          %s384 = sadd.s32 %s35, %s34
          %s385 = smul.addr %s384, 128
          %s386 = scalar_lea.hbm %s0, %s385
          %s388 = sshll.u32 %s380, 4
          %s389 = int_to_ptr.vmem [resolvable:$true] %s388
          %391 = dma.hbm_to_vmem [thread:$0]  %s386, 128, %s389, %s377
        $region48: #{tpu_custom_call.1} parent=43 // pred_fallthru
          _
        // Predicated region
        $region49: #{tpu_custom_call.1} parent=43 // pred_check
          %p392 = pneg %p87
        $region50: #{tpu_custom_call.1} parent=43 // pred_check_branch
          %394 = sbr.rel (%p392) target = $region52
        $region51: #{tpu_custom_call.1} parent=43 // pred_region
          %s395 = sand.u32 %s27, 1
          %s396 = scalar_lea.sflag [#allocation8], %s395
          %s397 = sand.u32 %s77, 1
          %s398 = smul.addr %s397, 128
          %s399 = scalar_lea.vmem [#allocation7], %s398
          %s401 = ssub.s32 2048, 2048
          %402 = vsyncadd %s396, %s401
          %s403 = smul.addr %s34, 16
          %s404 = smul.addr %s403, 128
          %s405 = scalar_lea.hbm %s1, %s404
          %s406 = sshll.u32 %s399, 4
          %s407 = int_to_ptr.vmem [resolvable:$true] %s406
          %412 = dma.hbm_to_vmem [thread:$0]  %s405, 2048, %s407, %s396, 128, 128, 8
        $region52: #{tpu_custom_call.1} parent=43 // pred_fallthru
          _
        // Predicated region
        $region53: #{tpu_custom_call.1} parent=43 // pred_check
          %p413 = pneg %p113
        $region54: #{tpu_custom_call.1} parent=43 // pred_check_branch
          %415 = sbr.rel (%p413) target = $region56
        $region55: #{tpu_custom_call.1} parent=43 // pred_region
          %s416 = sand.u32 %s27, 1
          %s417 = scalar_lea.sflag [#allocation8], %s416
          %s418 = sand.u32 %s103, 1
          %s419 = smul.addr %s418, 128
          %s420 = scalar_lea.vmem [#allocation9], %s419
          %s422 = ssub.s32 2048, 2048
          %423 = vsyncadd %s417, %s422
          %s424 = smul.addr %s34, 16
          %s425 = smul.addr %s424, 128
          %s426 = scalar_lea.hbm %s2, %s425
          %s427 = sshll.u32 %s420, 4
          %s428 = int_to_ptr.vmem [resolvable:$true] %s427
          %433 = dma.hbm_to_vmem [thread:$0]  %s426, 2048, %s428, %s417, 128, 128, 8
        $region56: #{tpu_custom_call.1} parent=43 // pred_fallthru
          _
      $region44: #{tpu_custom_call.1} parent=5 // pred_fallthru
        _
      %p434 = scmp.le.s32.totalorder 1, %s27
      %p435 = scmp.lt.s32.totalorder %s27, 3
      %p436 = pnand %p434, %p435
      %p437 = pneg %p436
      // Predicated region
      $region57: #{tpu_custom_call.1} parent=5 // pred_check
        _
      $region58: #{tpu_custom_call.1} parent=5 // pred_check_branch
        %439 = sbr.rel (%p436) target = $region60
      $region59: #{tpu_custom_call.1} parent=5 // pred_region
        %s440 = ssub.s32 %s27, 1
        %s441 = sand.u32 %s54, 1
        %s442 = scalar_lea.sflag [#allocation5], %s441
        %s443 = sand.u32 %s54, 1
        %s444 = smul.addr %s443, 8
        %s445 = scalar_lea.vmem [#allocation4], %s444
        // Predicated region
        $region61: #{tpu_custom_call.1} parent=59 // pred_check
          %p446 = pneg %p67
        $region62: #{tpu_custom_call.1} parent=59 // pred_check_branch
          %448 = sbr.rel (%p446) target = $region64
        $region63: #{tpu_custom_call.1} parent=59 // pred_region
          %449 = dma.done %s442, 128
        $region64: #{tpu_custom_call.1} parent=59 // pred_fallthru
          _
        %s450 = sand.u32 %s32, 1
        %s451 = scalar_lea.sflag [#allocation8], %s450
        %s452 = sand.u32 %s80, 1
        %s453 = smul.addr %s452, 128
        %s454 = scalar_lea.vmem [#allocation7], %s453
        // Predicated region
        $region65: #{tpu_custom_call.1} parent=59 // pred_check
          %p455 = pneg %p93
        $region66: #{tpu_custom_call.1} parent=59 // pred_check_branch
          %457 = sbr.rel (%p455) target = $region68
        $region67: #{tpu_custom_call.1} parent=59 // pred_region
          %458 = dma.done %s451, 2048
        $region68: #{tpu_custom_call.1} parent=59 // pred_fallthru
          _
        %s459 = sand.u32 %s32, 1
        %s460 = scalar_lea.sflag [#allocation8], %s459
        %s461 = sand.u32 %s106, 1
        %s462 = smul.addr %s461, 128
        %s463 = scalar_lea.vmem [#allocation9], %s462
        // Predicated region
        $region69: #{tpu_custom_call.1} parent=59 // pred_check
          %p464 = pneg %p119
        $region70: #{tpu_custom_call.1} parent=59 // pred_check_branch
          %466 = sbr.rel (%p464) target = $region72
        $region71: #{tpu_custom_call.1} parent=59 // pred_region
          %467 = dma.done %s460, 2048
        $region72: #{tpu_custom_call.1} parent=59 // pred_fallthru
          _
        // Predicated region
        $region73: #{tpu_custom_call.1} parent=59 // pred_check
          %p468 = pneg %p140
        $region74: #{tpu_custom_call.1} parent=59 // pred_check_branch
          %470 = sbr.rel (%p468) target = $region76
        $region75: #{tpu_custom_call.1} parent=59 // pred_region
          %471 = dma.done [#allocation11], 2048
        $region76: #{tpu_custom_call.1} parent=59 // pred_fallthru
          _
        // Predicated region
        $region77: #{tpu_custom_call.1} parent=59 // pred_check
          %p472 = pneg %p161
        $region78: #{tpu_custom_call.1} parent=59 // pred_check_branch
          %474 = sbr.rel (%p472) target = $region80
        $region79: #{tpu_custom_call.1} parent=59 // pred_region
          %475 = dma.done [#allocation11], 2048
        $region80: #{tpu_custom_call.1} parent=59 // pred_fallthru
          _
        // Predicated region
        $region81: #{tpu_custom_call.1} parent=59 // pred_check
          %p476 = pneg %p182
        $region82: #{tpu_custom_call.1} parent=59 // pred_check_branch
          %478 = sbr.rel (%p476) target = $region84
        $region83: #{tpu_custom_call.1} parent=59 // pred_region
          %479 = dma.done [#allocation14], 2048
        $region84: #{tpu_custom_call.1} parent=59 // pred_fallthru
          _
        %s480 = sand.u32 %s54, 1
        %s481 = scalar_lea.sflag [#allocation5], %s480
        %s482 = sand.u32 %s54, 1
        %s483 = smul.addr %s482, 8
        %s484 = scalar_lea.vmem [#allocation4], %s483
        %p485 = pneg %p67
        %p486 = pneg %p64
        %s487 = sand.u32 %s32, 1
        %s488 = scalar_lea.sflag [#allocation8], %s487
        %s489 = sand.u32 %s80, 1
        %s490 = smul.addr %s489, 128
        %s491 = scalar_lea.vmem [#allocation7], %s490
        %p492 = pneg %p93
        %p493 = pneg %p90
        %s494 = sand.u32 %s32, 1
        %s495 = scalar_lea.sflag [#allocation8], %s494
        %s496 = sand.u32 %s106, 1
        %s497 = smul.addr %s496, 128
        %s498 = scalar_lea.vmem [#allocation9], %s497
        %p499 = pneg %p119
        %p500 = pneg %p116
        %p501 = pneg %p140
        %p502 = pneg %p137
        %p503 = pneg %p161
        %p504 = pneg %p158
        %p505 = pneg %p182
        %p506 = pneg %p179
        %p507 = pneg %p203
        %p508 = pneg %p200
        %p509 = pneg %p224
        %p510 = pneg %p221
        %p511 = pneg %p245
        %p512 = pneg %p242
        %p513 = scmp.lt.s32.totalorder %s37, 0
        %s514 = scalar_select %p513, %s37, 0
        %s515 = smul.addr %s514, 8
        %s516 = scalar_lea.vmem %s9, %s515
        %p517 = pneg %p271
        %p518 = pneg %p268
        %p519 = pneg %p299
        %p520 = pneg %p296
        %s521 = sand.u32 %s286, 1
        %s522 = scalar_lea.sflag [#allocation6], %s521
        %s523 = sand.u32 %s286, 1
        %s524 = smul.addr %s523, 8
        %s525 = scalar_lea.vmem [#allocation15], %s524
        %p526 = scmp.lt.s32.totalorder %s37, 0
        %s527 = scalar_select %p526, %s37, 0
        %s528 = smul.addr %s527, 8
        %s529 = scalar_lea.vmem %s9, %s528
        %p530 = scmp.eq.s32.totalorder %s37, 0
        // Predicated region
        $region85: #{tpu_custom_call.1} parent=59 // pred_check
          %p531 = pneg %p530
        $region86: #{tpu_custom_call.1} parent=59 // pred_check_branch
          %533 = sbr.rel (%p531) target = $region88
        $region87: #{tpu_custom_call.1} parent=59 // pred_region
          %v534 = vld [vmem:[%s454] sm:$0xff]
          %v535 = vld [vmem:[%s454 + $0x8] sm:$0xff]
          %v536 = vld [vmem:[%s454 + $0x10] sm:$0xff]
          %v537 = vld [vmem:[%s454 + $0x18] sm:$0xff]
          %v538 = vld [vmem:[%s454 + $0x20] sm:$0xff]
          %v539 = vld [vmem:[%s454 + $0x28] sm:$0xff]
          %v540 = vld [vmem:[%s454 + $0x30] sm:$0xff]
          %v541 = vld [vmem:[%s454 + $0x38] sm:$0xff]
          %v542 = vld [vmem:[%s454 + $0x40] sm:$0xff]
          %v543 = vld [vmem:[%s454 + $0x48] sm:$0xff]
          %v544 = vld [vmem:[%s454 + $0x50] sm:$0xff]
          %v545 = vld [vmem:[%s454 + $0x58] sm:$0xff]
          %v546 = vld [vmem:[%s454 + $0x60] sm:$0xff]
          %v547 = vld [vmem:[%s454 + $0x68] sm:$0xff]
          %v548 = vld [vmem:[%s454 + $0x70] sm:$0xff]
          %v549 = vld [vmem:[%s454 + $0x78] sm:$0xff]
          %v550 = vld [vmem:[#allocation12] sm:$0xff]
          %v551 = vld [vmem:[#allocation12 + $0x8] sm:$0xff]
          %v552 = vld [vmem:[#allocation12 + $0x10] sm:$0xff]
          %v553 = vld [vmem:[#allocation12 + $0x18] sm:$0xff]
          %v554 = vld [vmem:[#allocation12 + $0x20] sm:$0xff]
          %v555 = vld [vmem:[#allocation12 + $0x28] sm:$0xff]
          %v556 = vld [vmem:[#allocation12 + $0x30] sm:$0xff]
          %v557 = vld [vmem:[#allocation12 + $0x38] sm:$0xff]
          %v558 = vld [vmem:[#allocation12 + $0x40] sm:$0xff]
          %v559 = vld [vmem:[#allocation12 + $0x48] sm:$0xff]
          %v560 = vld [vmem:[#allocation12 + $0x50] sm:$0xff]
          %v561 = vld [vmem:[#allocation12 + $0x58] sm:$0xff]
          %v562 = vld [vmem:[#allocation12 + $0x60] sm:$0xff]
          %v563 = vld [vmem:[#allocation12 + $0x68] sm:$0xff]
          %v564 = vld [vmem:[#allocation12 + $0x70] sm:$0xff]
          %v565 = vld [vmem:[#allocation12 + $0x78] sm:$0xff]
          %v566 = vld [vmem:[%s7] sm:$0x1]
          %v568 = vlaneseq
          %v569 = vshrl.u32 %v568, 7
          %v570 = vsub.s32 0, %v569
          %v571 = vrot.slane %v566, %v570
          %573 = vmatprep.subr.mxu0 0.0
          %574 = vmatpush1.msra.mxu0 %v565
          %575 = vmatprep.subr.mxu0 0.0
          %576 = vmatpush1.msra.mxu0 %v564
          %577 = vmatprep.subr.mxu0 0.0
          %578 = vmatpush1.msra.mxu0 %v563
          %579 = vmatprep.subr.mxu0 0.0
          %580 = vmatpush1.msra.mxu0 %v562
          %581 = vmatprep.subr.mxu0 0.0
          %582 = vmatpush1.msra.mxu0 %v561
          %583 = vmatprep.subr.mxu0 0.0
          %584 = vmatpush1.msra.mxu0 %v560
          %585 = vmatprep.subr.mxu0 0.0
          %586 = vmatpush1.msra.mxu0 %v559
          %587 = vmatprep.subr.mxu0 0.0
          %588 = vmatpush1.msra.mxu0 %v558
          %589 = vmatprep.subr.mxu0 0.0
          %590 = vmatpush1.msra.mxu0 %v557
          %591 = vmatprep.subr.mxu0 0.0
          %592 = vmatpush1.msra.mxu0 %v556
          %593 = vmatprep.subr.mxu0 0.0
          %594 = vmatpush1.msra.mxu0 %v555
          %595 = vmatprep.subr.mxu0 0.0
          %596 = vmatpush1.msra.mxu0 %v554
          %597 = vmatprep.subr.mxu0 0.0
          %598 = vmatpush1.msra.mxu0 %v553
          %599 = vmatprep.subr.mxu0 0.0
          %600 = vmatpush1.msra.mxu0 %v552
          %601 = vmatprep.subr.mxu0 0.0
          %602 = vmatpush1.msra.mxu0 %v551
          %603 = vmatprep.subr.mxu0 0.0
          %604 = vmatpush1.msra.mxu0 %v550
          %605 = vmatprep.subr.mxu0 0.0
          %606 = vmatpush2.msra.mxu0 0.0
          %607 = vmatprep.subr.mxu0 0.0
          %608 = vmatpush2.msra.mxu0 0.0
          %609 = vmatprep.subr.mxu0 0.0
          %610 = vmatpush2.msra.mxu0 0.0
          %611 = vmatprep.subr.mxu0 0.0
          %612 = vmatpush2.msra.mxu0 0.0
          %613 = vmatprep.subr.mxu0 0.0
          %614 = vmatpush2.msra.mxu0 0.0
          %615 = vmatprep.subr.mxu0 0.0
          %616 = vmatpush2.msra.mxu0 0.0
          %617 = vmatprep.subr.mxu0 0.0
          %618 = vmatpush2.msra.mxu0 0.0
          %619 = vmatprep.subr.mxu0 0.0
          %620 = vmatpush2.msra.mxu0 0.0
          %621 = vmatprep.subr.mxu0 0.0
          %622 = vmatpush2.msra.mxu0 0.0
          %623 = vmatprep.subr.mxu0 0.0
          %624 = vmatpush2.msra.mxu0 0.0
          %625 = vmatprep.subr.mxu0 0.0
          %626 = vmatpush2.msra.mxu0 0.0
          %627 = vmatprep.subr.mxu0 0.0
          %628 = vmatpush2.msra.mxu0 0.0
          %629 = vmatprep.subr.mxu0 0.0
          %630 = vmatpush2.msra.mxu0 0.0
          %631 = vmatprep.subr.mxu0 0.0
          %632 = vmatpush2.msra.mxu0 0.0
          %633 = vmatprep.subr.mxu0 0.0
          %634 = vmatpush2.msra.mxu0 0.0
          %635 = vmatprep.subr.mxu0 0.0
          %636 = vmatpush2.msra.mxu0 0.0
          %637 = vmatprep.mubr.f32.mxu0 0.0
          %638 = vmatmul.mubr.f32.gmra.mxu0 %v534
          %v639 = vpop.f32.mrf.mxu0
          %v640 = vadd.f32 %v571, %v639
          %v641 = vpop.f32.mrf.mxu0
          %642 = vmatprep.mubr.f32.mxu0 0.0
          %643 = vmatmul.mubr.f32.gmra.mxu0 %v535
          %v644 = vpop.f32.mrf.mxu0
          %v645 = vadd.f32 %v571, %v644
          %v646 = vpop.f32.mrf.mxu0
          %647 = vmatprep.mubr.f32.mxu0 0.0
          %648 = vmatmul.mubr.f32.gmra.mxu0 %v536
          %v649 = vpop.f32.mrf.mxu0
          %v650 = vadd.f32 %v571, %v649
          %v651 = vpop.f32.mrf.mxu0
          %652 = vmatprep.mubr.f32.mxu0 0.0
          %653 = vmatmul.mubr.f32.gmra.mxu0 %v537
          %v654 = vpop.f32.mrf.mxu0
          %v655 = vadd.f32 %v571, %v654
          %v656 = vpop.f32.mrf.mxu0
          %657 = vmatprep.mubr.f32.mxu0 0.0
          %658 = vmatmul.mubr.f32.gmra.mxu0 %v538
          %v659 = vpop.f32.mrf.mxu0
          %v660 = vadd.f32 %v571, %v659
          %v661 = vpop.f32.mrf.mxu0
          %662 = vmatprep.mubr.f32.mxu0 0.0
          %663 = vmatmul.mubr.f32.gmra.mxu0 %v539
          %v664 = vpop.f32.mrf.mxu0
          %v665 = vadd.f32 %v571, %v664
          %v666 = vpop.f32.mrf.mxu0
          %667 = vmatprep.mubr.f32.mxu0 0.0
          %668 = vmatmul.mubr.f32.gmra.mxu0 %v540
          %v669 = vpop.f32.mrf.mxu0
          %v670 = vadd.f32 %v571, %v669
          %v671 = vpop.f32.mrf.mxu0
          %672 = vmatprep.mubr.f32.mxu0 0.0
          %673 = vmatmul.mubr.f32.gmra.mxu0 %v541
          %v674 = vpop.f32.mrf.mxu0
          %v675 = vadd.f32 %v571, %v674
          %v676 = vpop.f32.mrf.mxu0
          %677 = vmatprep.mubr.f32.mxu0 0.0
          %678 = vmatmul.mubr.f32.gmra.mxu0 %v542
          %v679 = vpop.f32.mrf.mxu0
          %v680 = vadd.f32 %v571, %v679
          %v681 = vpop.f32.mrf.mxu0
          %682 = vmatprep.mubr.f32.mxu0 0.0
          %683 = vmatmul.mubr.f32.gmra.mxu0 %v543
          %v684 = vpop.f32.mrf.mxu0
          %v685 = vadd.f32 %v571, %v684
          %v686 = vpop.f32.mrf.mxu0
          %687 = vmatprep.mubr.f32.mxu0 0.0
          %688 = vmatmul.mubr.f32.gmra.mxu0 %v544
          %v689 = vpop.f32.mrf.mxu0
          %v690 = vadd.f32 %v571, %v689
          %v691 = vpop.f32.mrf.mxu0
          %692 = vmatprep.mubr.f32.mxu0 0.0
          %693 = vmatmul.mubr.f32.gmra.mxu0 %v545
          %v694 = vpop.f32.mrf.mxu0
          %v695 = vadd.f32 %v571, %v694
          %v696 = vpop.f32.mrf.mxu0
          %697 = vmatprep.mubr.f32.mxu0 0.0
          %698 = vmatmul.mubr.f32.gmra.mxu0 %v546
          %v699 = vpop.f32.mrf.mxu0
          %v700 = vadd.f32 %v571, %v699
          %v701 = vpop.f32.mrf.mxu0
          %702 = vmatprep.mubr.f32.mxu0 0.0
          %703 = vmatmul.mubr.f32.gmra.mxu0 %v547
          %v704 = vpop.f32.mrf.mxu0
          %v705 = vadd.f32 %v571, %v704
          %v706 = vpop.f32.mrf.mxu0
          %707 = vmatprep.mubr.f32.mxu0 0.0
          %708 = vmatmul.mubr.f32.gmra.mxu0 %v548
          %v709 = vpop.f32.mrf.mxu0
          %v710 = vadd.f32 %v571, %v709
          %v711 = vpop.f32.mrf.mxu0
          %712 = vmatprep.mubr.f32.mxu0 0.0
          %713 = vmatmul.mubr.f32.gmra.mxu0 %v549
          %v714 = vpop.f32.mrf.mxu0
          %v715 = vadd.f32 %v571, %v714
          %v716 = vpop.f32.mrf.mxu0
          %717 = vdwg.mxu0
          %v718 = vld [vmem:[%s463] sm:$0xff]
          %v719 = vld [vmem:[%s463 + $0x8] sm:$0xff]
          %v720 = vld [vmem:[%s463 + $0x10] sm:$0xff]
          %v721 = vld [vmem:[%s463 + $0x18] sm:$0xff]
          %v722 = vld [vmem:[%s463 + $0x20] sm:$0xff]
          %v723 = vld [vmem:[%s463 + $0x28] sm:$0xff]
          %v724 = vld [vmem:[%s463 + $0x30] sm:$0xff]
          %v725 = vld [vmem:[%s463 + $0x38] sm:$0xff]
          %v726 = vld [vmem:[%s463 + $0x40] sm:$0xff]
          %v727 = vld [vmem:[%s463 + $0x48] sm:$0xff]
          %v728 = vld [vmem:[%s463 + $0x50] sm:$0xff]
          %v729 = vld [vmem:[%s463 + $0x58] sm:$0xff]
          %v730 = vld [vmem:[%s463 + $0x60] sm:$0xff]
          %v731 = vld [vmem:[%s463 + $0x68] sm:$0xff]
          %v732 = vld [vmem:[%s463 + $0x70] sm:$0xff]
          %v733 = vld [vmem:[%s463 + $0x78] sm:$0xff]
          %v734 = vld [vmem:[#allocation13] sm:$0xff]
          %v735 = vld [vmem:[#allocation13 + $0x8] sm:$0xff]
          %v736 = vld [vmem:[#allocation13 + $0x10] sm:$0xff]
          %v737 = vld [vmem:[#allocation13 + $0x18] sm:$0xff]
          %v738 = vld [vmem:[#allocation13 + $0x20] sm:$0xff]
          %v739 = vld [vmem:[#allocation13 + $0x28] sm:$0xff]
          %v740 = vld [vmem:[#allocation13 + $0x30] sm:$0xff]
          %v741 = vld [vmem:[#allocation13 + $0x38] sm:$0xff]
          %v742 = vld [vmem:[#allocation13 + $0x40] sm:$0xff]
          %v743 = vld [vmem:[#allocation13 + $0x48] sm:$0xff]
          %v744 = vld [vmem:[#allocation13 + $0x50] sm:$0xff]
          %v745 = vld [vmem:[#allocation13 + $0x58] sm:$0xff]
          %v746 = vld [vmem:[#allocation13 + $0x60] sm:$0xff]
          %v747 = vld [vmem:[#allocation13 + $0x68] sm:$0xff]
          %v748 = vld [vmem:[#allocation13 + $0x70] sm:$0xff]
          %v749 = vld [vmem:[#allocation13 + $0x78] sm:$0xff]
          %v750 = vld [vmem:[%s8] sm:$0x1]
          %v752 = vlaneseq
          %v753 = vshrl.u32 %v752, 7
          %v754 = vsub.s32 0, %v753
          %v755 = vrot.slane %v750, %v754
          %757 = vmatprep.subr.mxu0 0.0
          %758 = vmatpush1.msra.mxu0 %v749
          %759 = vmatprep.subr.mxu0 0.0
          %760 = vmatpush1.msra.mxu0 %v748
          %761 = vmatprep.subr.mxu0 0.0
          %762 = vmatpush1.msra.mxu0 %v747
          %763 = vmatprep.subr.mxu0 0.0
          %764 = vmatpush1.msra.mxu0 %v746
          %765 = vmatprep.subr.mxu0 0.0
          %766 = vmatpush1.msra.mxu0 %v745
          %767 = vmatprep.subr.mxu0 0.0
          %768 = vmatpush1.msra.mxu0 %v744
          %769 = vmatprep.subr.mxu0 0.0
          %770 = vmatpush1.msra.mxu0 %v743
          %771 = vmatprep.subr.mxu0 0.0
          %772 = vmatpush1.msra.mxu0 %v742
          %773 = vmatprep.subr.mxu0 0.0
          %774 = vmatpush1.msra.mxu0 %v741
          %775 = vmatprep.subr.mxu0 0.0
          %776 = vmatpush1.msra.mxu0 %v740
          %777 = vmatprep.subr.mxu0 0.0
          %778 = vmatpush1.msra.mxu0 %v739
          %779 = vmatprep.subr.mxu0 0.0
          %780 = vmatpush1.msra.mxu0 %v738
          %781 = vmatprep.subr.mxu0 0.0
          %782 = vmatpush1.msra.mxu0 %v737
          %783 = vmatprep.subr.mxu0 0.0
          %784 = vmatpush1.msra.mxu0 %v736
          %785 = vmatprep.subr.mxu0 0.0
          %786 = vmatpush1.msra.mxu0 %v735
          %787 = vmatprep.subr.mxu0 0.0
          %788 = vmatpush1.msra.mxu0 %v734
          %789 = vmatprep.subr.mxu0 0.0
          %790 = vmatpush2.msra.mxu0 0.0
          %791 = vmatprep.subr.mxu0 0.0
          %792 = vmatpush2.msra.mxu0 0.0
          %793 = vmatprep.subr.mxu0 0.0
          %794 = vmatpush2.msra.mxu0 0.0
          %795 = vmatprep.subr.mxu0 0.0
          %796 = vmatpush2.msra.mxu0 0.0
          %797 = vmatprep.subr.mxu0 0.0
          %798 = vmatpush2.msra.mxu0 0.0
          %799 = vmatprep.subr.mxu0 0.0
          %800 = vmatpush2.msra.mxu0 0.0
          %801 = vmatprep.subr.mxu0 0.0
          %802 = vmatpush2.msra.mxu0 0.0
          %803 = vmatprep.subr.mxu0 0.0
          %804 = vmatpush2.msra.mxu0 0.0
          %805 = vmatprep.subr.mxu0 0.0
          %806 = vmatpush2.msra.mxu0 0.0
          %807 = vmatprep.subr.mxu0 0.0
          %808 = vmatpush2.msra.mxu0 0.0
          %809 = vmatprep.subr.mxu0 0.0
          %810 = vmatpush2.msra.mxu0 0.0
          %811 = vmatprep.subr.mxu0 0.0
          %812 = vmatpush2.msra.mxu0 0.0
          %813 = vmatprep.subr.mxu0 0.0
          %814 = vmatpush2.msra.mxu0 0.0
          %815 = vmatprep.subr.mxu0 0.0
          %816 = vmatpush2.msra.mxu0 0.0
          %817 = vmatprep.subr.mxu0 0.0
          %818 = vmatpush2.msra.mxu0 0.0
          %819 = vmatprep.subr.mxu0 0.0
          %820 = vmatpush2.msra.mxu0 0.0
          %821 = vmatprep.mubr.f32.mxu0 0.0
          %822 = vmatmul.mubr.f32.gmra.mxu0 %v718
          %v823 = vpop.f32.mrf.mxu0
          %v824 = vadd.f32 %v755, %v823
          %v825 = vpop.f32.mrf.mxu0
          %826 = vmatprep.mubr.f32.mxu0 0.0
          %827 = vmatmul.mubr.f32.gmra.mxu0 %v719
          %v828 = vpop.f32.mrf.mxu0
          %v829 = vadd.f32 %v755, %v828
          %v830 = vpop.f32.mrf.mxu0
          %831 = vmatprep.mubr.f32.mxu0 0.0
          %832 = vmatmul.mubr.f32.gmra.mxu0 %v720
          %v833 = vpop.f32.mrf.mxu0
          %v834 = vadd.f32 %v755, %v833
          %v835 = vpop.f32.mrf.mxu0
          %836 = vmatprep.mubr.f32.mxu0 0.0
          %837 = vmatmul.mubr.f32.gmra.mxu0 %v721
          %v838 = vpop.f32.mrf.mxu0
          %v839 = vadd.f32 %v755, %v838
          %v840 = vpop.f32.mrf.mxu0
          %841 = vmatprep.mubr.f32.mxu0 0.0
          %842 = vmatmul.mubr.f32.gmra.mxu0 %v722
          %v843 = vpop.f32.mrf.mxu0
          %v844 = vadd.f32 %v755, %v843
          %v845 = vpop.f32.mrf.mxu0
          %846 = vmatprep.mubr.f32.mxu0 0.0
          %847 = vmatmul.mubr.f32.gmra.mxu0 %v723
          %v848 = vpop.f32.mrf.mxu0
          %v849 = vadd.f32 %v755, %v848
          %v850 = vpop.f32.mrf.mxu0
          %851 = vmatprep.mubr.f32.mxu0 0.0
          %852 = vmatmul.mubr.f32.gmra.mxu0 %v724
          %v853 = vpop.f32.mrf.mxu0
          %v854 = vadd.f32 %v755, %v853
          %v855 = vpop.f32.mrf.mxu0
          %856 = vmatprep.mubr.f32.mxu0 0.0
          %857 = vmatmul.mubr.f32.gmra.mxu0 %v725
          %v858 = vpop.f32.mrf.mxu0
          %v859 = vadd.f32 %v755, %v858
          %v860 = vpop.f32.mrf.mxu0
          %861 = vmatprep.mubr.f32.mxu0 0.0
          %862 = vmatmul.mubr.f32.gmra.mxu0 %v726
          %v863 = vpop.f32.mrf.mxu0
          %v864 = vadd.f32 %v755, %v863
          %v865 = vpop.f32.mrf.mxu0
          %866 = vmatprep.mubr.f32.mxu0 0.0
          %867 = vmatmul.mubr.f32.gmra.mxu0 %v727
          %v868 = vpop.f32.mrf.mxu0
          %v869 = vadd.f32 %v755, %v868
          %v870 = vpop.f32.mrf.mxu0
          %871 = vmatprep.mubr.f32.mxu0 0.0
          %872 = vmatmul.mubr.f32.gmra.mxu0 %v728
          %v873 = vpop.f32.mrf.mxu0
          %v874 = vadd.f32 %v755, %v873
          %v875 = vpop.f32.mrf.mxu0
          %876 = vmatprep.mubr.f32.mxu0 0.0
          %877 = vmatmul.mubr.f32.gmra.mxu0 %v729
          %v878 = vpop.f32.mrf.mxu0
          %v879 = vadd.f32 %v755, %v878
          %v880 = vpop.f32.mrf.mxu0
          %881 = vmatprep.mubr.f32.mxu0 0.0
          %882 = vmatmul.mubr.f32.gmra.mxu0 %v730
          %v883 = vpop.f32.mrf.mxu0
          %v884 = vadd.f32 %v755, %v883
          %v885 = vpop.f32.mrf.mxu0
          %886 = vmatprep.mubr.f32.mxu0 0.0
          %887 = vmatmul.mubr.f32.gmra.mxu0 %v731
          %v888 = vpop.f32.mrf.mxu0
          %v889 = vadd.f32 %v755, %v888
          %v890 = vpop.f32.mrf.mxu0
          %891 = vmatprep.mubr.f32.mxu0 0.0
          %892 = vmatmul.mubr.f32.gmra.mxu0 %v732
          %v893 = vpop.f32.mrf.mxu0
          %v894 = vadd.f32 %v755, %v893
          %v895 = vpop.f32.mrf.mxu0
          %896 = vmatprep.mubr.f32.mxu0 0.0
          %897 = vmatmul.mubr.f32.gmra.mxu0 %v733
          %v898 = vpop.f32.mrf.mxu0
          %v899 = vadd.f32 %v755, %v898
          %v900 = vpop.f32.mrf.mxu0
          %901 = vdwg.mxu0
          %902 = vst [vmem:[#allocation2] sm:$0xff] %v640
          %903 = vst [vmem:[#allocation2 + $0x8] sm:$0xff] %v645
          %904 = vst [vmem:[#allocation2 + $0x10] sm:$0xff] %v650
          %905 = vst [vmem:[#allocation2 + $0x18] sm:$0xff] %v655
          %906 = vst [vmem:[#allocation2 + $0x20] sm:$0xff] %v660
          %907 = vst [vmem:[#allocation2 + $0x28] sm:$0xff] %v665
          %908 = vst [vmem:[#allocation2 + $0x30] sm:$0xff] %v670
          %909 = vst [vmem:[#allocation2 + $0x38] sm:$0xff] %v675
          %910 = vst [vmem:[#allocation2 + $0x40] sm:$0xff] %v680
          %911 = vst [vmem:[#allocation2 + $0x48] sm:$0xff] %v685
          %912 = vst [vmem:[#allocation2 + $0x50] sm:$0xff] %v690
          %913 = vst [vmem:[#allocation2 + $0x58] sm:$0xff] %v695
          %914 = vst [vmem:[#allocation2 + $0x60] sm:$0xff] %v700
          %915 = vst [vmem:[#allocation2 + $0x68] sm:$0xff] %v705
          %916 = vst [vmem:[#allocation2 + $0x70] sm:$0xff] %v710
          %917 = vst [vmem:[#allocation2 + $0x78] sm:$0xff] %v715
          %918 = vst [vmem:[#allocation3] sm:$0xff] %v824
          %919 = vst [vmem:[#allocation3 + $0x8] sm:$0xff] %v829
          %920 = vst [vmem:[#allocation3 + $0x10] sm:$0xff] %v834
          %921 = vst [vmem:[#allocation3 + $0x18] sm:$0xff] %v839
          %922 = vst [vmem:[#allocation3 + $0x20] sm:$0xff] %v844
          %923 = vst [vmem:[#allocation3 + $0x28] sm:$0xff] %v849
          %924 = vst [vmem:[#allocation3 + $0x30] sm:$0xff] %v854
          %925 = vst [vmem:[#allocation3 + $0x38] sm:$0xff] %v859
          %926 = vst [vmem:[#allocation3 + $0x40] sm:$0xff] %v864
          %927 = vst [vmem:[#allocation3 + $0x48] sm:$0xff] %v869
          %928 = vst [vmem:[#allocation3 + $0x50] sm:$0xff] %v874
          %929 = vst [vmem:[#allocation3 + $0x58] sm:$0xff] %v879
          %930 = vst [vmem:[#allocation3 + $0x60] sm:$0xff] %v884
          %931 = vst [vmem:[#allocation3 + $0x68] sm:$0xff] %v889
          %932 = vst [vmem:[#allocation3 + $0x70] sm:$0xff] %v894
          %933 = vst [vmem:[#allocation3 + $0x78] sm:$0xff] %v899
        $region88: #{tpu_custom_call.1} parent=59 // pred_fallthru
          _
        %v934 = vld [vmem:[%s445] sm:$0xff]
        %v935 = vld [vmem:[#allocation10] sm:$0xff]
        %v936 = vld [vmem:[#allocation10 + $0x8] sm:$0xff]
        %v937 = vld [vmem:[#allocation10 + $0x10] sm:$0xff]
        %v938 = vld [vmem:[#allocation10 + $0x18] sm:$0xff]
        %v939 = vld [vmem:[#allocation10 + $0x20] sm:$0xff]
        %v940 = vld [vmem:[#allocation10 + $0x28] sm:$0xff]
        %v941 = vld [vmem:[#allocation10 + $0x30] sm:$0xff]
        %v942 = vld [vmem:[#allocation10 + $0x38] sm:$0xff]
        %v943 = vld [vmem:[#allocation10 + $0x40] sm:$0xff]
        %v944 = vld [vmem:[#allocation10 + $0x48] sm:$0xff]
        %v945 = vld [vmem:[#allocation10 + $0x50] sm:$0xff]
        %v946 = vld [vmem:[#allocation10 + $0x58] sm:$0xff]
        %v947 = vld [vmem:[#allocation10 + $0x60] sm:$0xff]
        %v948 = vld [vmem:[#allocation10 + $0x68] sm:$0xff]
        %v949 = vld [vmem:[#allocation10 + $0x70] sm:$0xff]
        %v950 = vld [vmem:[#allocation10 + $0x78] sm:$0xff]
        %v951 = vld [vmem:[%s6] sm:$0x1]
        %v953 = vlaneseq
        %v954 = vshrl.u32 %v953, 7
        %v955 = vsub.s32 0, %v954
        %v956 = vrot.slane %v951, %v955
        %958 = vmatprep.subr.mxu0 0.0
        %959 = vmatpush1.msra.mxu0 %v950
        %960 = vmatprep.subr.mxu0 0.0
        %961 = vmatpush1.msra.mxu0 %v949
        %962 = vmatprep.subr.mxu0 0.0
        %963 = vmatpush1.msra.mxu0 %v948
        %964 = vmatprep.subr.mxu0 0.0
        %965 = vmatpush1.msra.mxu0 %v947
        %966 = vmatprep.subr.mxu0 0.0
        %967 = vmatpush1.msra.mxu0 %v946
        %968 = vmatprep.subr.mxu0 0.0
        %969 = vmatpush1.msra.mxu0 %v945
        %970 = vmatprep.subr.mxu0 0.0
        %971 = vmatpush1.msra.mxu0 %v944
        %972 = vmatprep.subr.mxu0 0.0
        %973 = vmatpush1.msra.mxu0 %v943
        %974 = vmatprep.subr.mxu0 0.0
        %975 = vmatpush1.msra.mxu0 %v942
        %976 = vmatprep.subr.mxu0 0.0
        %977 = vmatpush1.msra.mxu0 %v941
        %978 = vmatprep.subr.mxu0 0.0
        %979 = vmatpush1.msra.mxu0 %v940
        %980 = vmatprep.subr.mxu0 0.0
        %981 = vmatpush1.msra.mxu0 %v939
        %982 = vmatprep.subr.mxu0 0.0
        %983 = vmatpush1.msra.mxu0 %v938
        %984 = vmatprep.subr.mxu0 0.0
        %985 = vmatpush1.msra.mxu0 %v937
        %986 = vmatprep.subr.mxu0 0.0
        %987 = vmatpush1.msra.mxu0 %v936
        %988 = vmatprep.subr.mxu0 0.0
        %989 = vmatpush1.msra.mxu0 %v935
        %990 = vmatprep.subr.mxu0 0.0
        %991 = vmatpush2.msra.mxu0 0.0
        %992 = vmatprep.subr.mxu0 0.0
        %993 = vmatpush2.msra.mxu0 0.0
        %994 = vmatprep.subr.mxu0 0.0
        %995 = vmatpush2.msra.mxu0 0.0
        %996 = vmatprep.subr.mxu0 0.0
        %997 = vmatpush2.msra.mxu0 0.0
        %998 = vmatprep.subr.mxu0 0.0
        %999 = vmatpush2.msra.mxu0 0.0
        %1000 = vmatprep.subr.mxu0 0.0
        %1001 = vmatpush2.msra.mxu0 0.0
        %1002 = vmatprep.subr.mxu0 0.0
        %1003 = vmatpush2.msra.mxu0 0.0
        %1004 = vmatprep.subr.mxu0 0.0
        %1005 = vmatpush2.msra.mxu0 0.0
        %1006 = vmatprep.subr.mxu0 0.0
        %1007 = vmatpush2.msra.mxu0 0.0
        %1008 = vmatprep.subr.mxu0 0.0
        %1009 = vmatpush2.msra.mxu0 0.0
        %1010 = vmatprep.subr.mxu0 0.0
        %1011 = vmatpush2.msra.mxu0 0.0
        %1012 = vmatprep.subr.mxu0 0.0
        %1013 = vmatpush2.msra.mxu0 0.0
        %1014 = vmatprep.subr.mxu0 0.0
        %1015 = vmatpush2.msra.mxu0 0.0
        %1016 = vmatprep.subr.mxu0 0.0
        %1017 = vmatpush2.msra.mxu0 0.0
        %1018 = vmatprep.subr.mxu0 0.0
        %1019 = vmatpush2.msra.mxu0 0.0
        %1020 = vmatprep.subr.mxu0 0.0
        %1021 = vmatpush2.msra.mxu0 0.0
        %1022 = vmatprep.mubr.f32.mxu0 0.0
        %1023 = vmatmul.mubr.f32.gmra.mxu0 %v934
        %v1024 = vpop.f32.mrf.mxu0
        %v1025 = vadd.f32 %v956, %v1024
        %v1026 = vpop.f32.mrf.mxu0
        %1027 = vdwg.mxu0
        %v1028 = vld [vmem:[#allocation2] sm:$0xff]
        %v1029 = vld [vmem:[#allocation2 + $0x8] sm:$0xff]
        %v1030 = vld [vmem:[#allocation2 + $0x10] sm:$0xff]
        %v1031 = vld [vmem:[#allocation2 + $0x18] sm:$0xff]
        %v1032 = vld [vmem:[#allocation2 + $0x20] sm:$0xff]
        %v1033 = vld [vmem:[#allocation2 + $0x28] sm:$0xff]
        %v1034 = vld [vmem:[#allocation2 + $0x30] sm:$0xff]
        %v1035 = vld [vmem:[#allocation2 + $0x38] sm:$0xff]
        %v1036 = vld [vmem:[#allocation2 + $0x40] sm:$0xff]
        %v1037 = vld [vmem:[#allocation2 + $0x48] sm:$0xff]
        %v1038 = vld [vmem:[#allocation2 + $0x50] sm:$0xff]
        %v1039 = vld [vmem:[#allocation2 + $0x58] sm:$0xff]
        %v1040 = vld [vmem:[#allocation2 + $0x60] sm:$0xff]
        %v1041 = vld [vmem:[#allocation2 + $0x68] sm:$0xff]
        %v1042 = vld [vmem:[#allocation2 + $0x70] sm:$0xff]
        %v1043 = vld [vmem:[#allocation2 + $0x78] sm:$0xff]
        %v1044 = vld [vmem:[%s529] sm:$0xff]
        %1045 = vmatprep.subr.mxu0 0.0
        %1046 = vmatpush1.xpose.msra.mxu0 %v1043
        %1047 = vmatprep.subr.mxu0 0.0
        %1048 = vmatpush1.xpose.msra.mxu0 %v1042
        %1049 = vmatprep.subr.mxu0 0.0
        %1050 = vmatpush1.xpose.msra.mxu0 %v1041
        %1051 = vmatprep.subr.mxu0 0.0
        %1052 = vmatpush1.xpose.msra.mxu0 %v1040
        %1053 = vmatprep.subr.mxu0 0.0
        %1054 = vmatpush1.xpose.msra.mxu0 %v1039
        %1055 = vmatprep.subr.mxu0 0.0
        %1056 = vmatpush1.xpose.msra.mxu0 %v1038
        %1057 = vmatprep.subr.mxu0 0.0
        %1058 = vmatpush1.xpose.msra.mxu0 %v1037
        %1059 = vmatprep.subr.mxu0 0.0
        %1060 = vmatpush1.xpose.msra.mxu0 %v1036
        %1061 = vmatprep.subr.mxu0 0.0
        %1062 = vmatpush1.xpose.msra.mxu0 %v1035
        %1063 = vmatprep.subr.mxu0 0.0
        %1064 = vmatpush1.xpose.msra.mxu0 %v1034
        %1065 = vmatprep.subr.mxu0 0.0
        %1066 = vmatpush1.xpose.msra.mxu0 %v1033
        %1067 = vmatprep.subr.mxu0 0.0
        %1068 = vmatpush1.xpose.msra.mxu0 %v1032
        %1069 = vmatprep.subr.mxu0 0.0
        %1070 = vmatpush1.xpose.msra.mxu0 %v1031
        %1071 = vmatprep.subr.mxu0 0.0
        %1072 = vmatpush1.xpose.msra.mxu0 %v1030
        %1073 = vmatprep.subr.mxu0 0.0
        %1074 = vmatpush1.xpose.msra.mxu0 %v1029
        %1075 = vmatprep.subr.mxu0 0.0
        %1076 = vmatpush1.xpose.msra.mxu0 %v1028
        %1077 = vmatprep.subr.mxu0 0.0
        %1078 = vmatpush2.xpose.msra.mxu0 0.0
        %1079 = vmatprep.subr.mxu0 0.0
        %1080 = vmatpush2.xpose.msra.mxu0 0.0
        %1081 = vmatprep.subr.mxu0 0.0
        %1082 = vmatpush2.xpose.msra.mxu0 0.0
        %1083 = vmatprep.subr.mxu0 0.0
        %1084 = vmatpush2.xpose.msra.mxu0 0.0
        %1085 = vmatprep.subr.mxu0 0.0
        %1086 = vmatpush2.xpose.msra.mxu0 0.0
        %1087 = vmatprep.subr.mxu0 0.0
        %1088 = vmatpush2.xpose.msra.mxu0 0.0
        %1089 = vmatprep.subr.mxu0 0.0
        %1090 = vmatpush2.xpose.msra.mxu0 0.0
        %1091 = vmatprep.subr.mxu0 0.0
        %1092 = vmatpush2.xpose.msra.mxu0 0.0
        %1093 = vmatprep.subr.mxu0 0.0
        %1094 = vmatpush2.xpose.msra.mxu0 0.0
        %1095 = vmatprep.subr.mxu0 0.0
        %1096 = vmatpush2.xpose.msra.mxu0 0.0
        %1097 = vmatprep.subr.mxu0 0.0
        %1098 = vmatpush2.xpose.msra.mxu0 0.0
        %1099 = vmatprep.subr.mxu0 0.0
        %1100 = vmatpush2.xpose.msra.mxu0 0.0
        %1101 = vmatprep.subr.mxu0 0.0
        %1102 = vmatpush2.xpose.msra.mxu0 0.0
        %1103 = vmatprep.subr.mxu0 0.0
        %1104 = vmatpush2.xpose.msra.mxu0 0.0
        %1105 = vmatprep.subr.mxu0 0.0
        %1106 = vmatpush2.xpose.msra.mxu0 0.0
        %1107 = vmatprep.subr.mxu0 0.0
        %1108 = vmatpush2.xpose.msra.mxu0 0.0
        %1109 = vmatprep.mubr.f32.mxu0 0.0
        %1110 = vmatmul.mubr.f32.gmra.mxu0 %v1025
        %v1111 = vpop.f32.mrf.mxu0
        %v1112 = vadd.f32 %v1044, %v1111
        %v1113 = vpop.f32.mrf.mxu0
        %1114 = vdwg.mxu0
        %1115 = vmax.xlane.f32.xlu0 %v1112
        %v1116 = vpop.xlane.xlu0 %1115
        %v1117 = vsub.f32 %v1112, %v1116
        %v1118 = vmul.f32 %v1117, 1.442695
        %v1119 = vpow.pop %v1118
        %1120 = vadd.xlane.f32.xlu0 %v1119
        %v1121 = vpop.xlane.xlu0 %1120
        %v1122 = vrcp.pop %v1121
        %v1123 = vmul.f32 %v1119, %v1122
        %v1124 = vld [vmem:[#allocation3] sm:$0xff]
        %v1125 = vld [vmem:[#allocation3 + $0x8] sm:$0xff]
        %v1126 = vld [vmem:[#allocation3 + $0x10] sm:$0xff]
        %v1127 = vld [vmem:[#allocation3 + $0x18] sm:$0xff]
        %v1128 = vld [vmem:[#allocation3 + $0x20] sm:$0xff]
        %v1129 = vld [vmem:[#allocation3 + $0x28] sm:$0xff]
        %v1130 = vld [vmem:[#allocation3 + $0x30] sm:$0xff]
        %v1131 = vld [vmem:[#allocation3 + $0x38] sm:$0xff]
        %v1132 = vld [vmem:[#allocation3 + $0x40] sm:$0xff]
        %v1133 = vld [vmem:[#allocation3 + $0x48] sm:$0xff]
        %v1134 = vld [vmem:[#allocation3 + $0x50] sm:$0xff]
        %v1135 = vld [vmem:[#allocation3 + $0x58] sm:$0xff]
        %v1136 = vld [vmem:[#allocation3 + $0x60] sm:$0xff]
        %v1137 = vld [vmem:[#allocation3 + $0x68] sm:$0xff]
        %v1138 = vld [vmem:[#allocation3 + $0x70] sm:$0xff]
        %v1139 = vld [vmem:[#allocation3 + $0x78] sm:$0xff]
        %1140 = vmatprep.subr.mxu0 0.0
        %1141 = vmatpush1.msra.mxu0 %v1139
        %1142 = vmatprep.subr.mxu0 0.0
        %1143 = vmatpush1.msra.mxu0 %v1138
        %1144 = vmatprep.subr.mxu0 0.0
        %1145 = vmatpush1.msra.mxu0 %v1137
        %1146 = vmatprep.subr.mxu0 0.0
        %1147 = vmatpush1.msra.mxu0 %v1136
        %1148 = vmatprep.subr.mxu0 0.0
        %1149 = vmatpush1.msra.mxu0 %v1135
        %1150 = vmatprep.subr.mxu0 0.0
        %1151 = vmatpush1.msra.mxu0 %v1134
        %1152 = vmatprep.subr.mxu0 0.0
        %1153 = vmatpush1.msra.mxu0 %v1133
        %1154 = vmatprep.subr.mxu0 0.0
        %1155 = vmatpush1.msra.mxu0 %v1132
        %1156 = vmatprep.subr.mxu0 0.0
        %1157 = vmatpush1.msra.mxu0 %v1131
        %1158 = vmatprep.subr.mxu0 0.0
        %1159 = vmatpush1.msra.mxu0 %v1130
        %1160 = vmatprep.subr.mxu0 0.0
        %1161 = vmatpush1.msra.mxu0 %v1129
        %1162 = vmatprep.subr.mxu0 0.0
        %1163 = vmatpush1.msra.mxu0 %v1128
        %1164 = vmatprep.subr.mxu0 0.0
        %1165 = vmatpush1.msra.mxu0 %v1127
        %1166 = vmatprep.subr.mxu0 0.0
        %1167 = vmatpush1.msra.mxu0 %v1126
        %1168 = vmatprep.subr.mxu0 0.0
        %1169 = vmatpush1.msra.mxu0 %v1125
        %1170 = vmatprep.subr.mxu0 0.0
        %1171 = vmatpush1.msra.mxu0 %v1124
        %1172 = vmatprep.subr.mxu0 0.0
        %1173 = vmatpush2.msra.mxu0 0.0
        %1174 = vmatprep.subr.mxu0 0.0
        %1175 = vmatpush2.msra.mxu0 0.0
        %1176 = vmatprep.subr.mxu0 0.0
        %1177 = vmatpush2.msra.mxu0 0.0
        %1178 = vmatprep.subr.mxu0 0.0
        %1179 = vmatpush2.msra.mxu0 0.0
        %1180 = vmatprep.subr.mxu0 0.0
        %1181 = vmatpush2.msra.mxu0 0.0
        %1182 = vmatprep.subr.mxu0 0.0
        %1183 = vmatpush2.msra.mxu0 0.0
        %1184 = vmatprep.subr.mxu0 0.0
        %1185 = vmatpush2.msra.mxu0 0.0
        %1186 = vmatprep.subr.mxu0 0.0
        %1187 = vmatpush2.msra.mxu0 0.0
        %1188 = vmatprep.subr.mxu0 0.0
        %1189 = vmatpush2.msra.mxu0 0.0
        %1190 = vmatprep.subr.mxu0 0.0
        %1191 = vmatpush2.msra.mxu0 0.0
        %1192 = vmatprep.subr.mxu0 0.0
        %1193 = vmatpush2.msra.mxu0 0.0
        %1194 = vmatprep.subr.mxu0 0.0
        %1195 = vmatpush2.msra.mxu0 0.0
        %1196 = vmatprep.subr.mxu0 0.0
        %1197 = vmatpush2.msra.mxu0 0.0
        %1198 = vmatprep.subr.mxu0 0.0
        %1199 = vmatpush2.msra.mxu0 0.0
        %1200 = vmatprep.subr.mxu0 0.0
        %1201 = vmatpush2.msra.mxu0 0.0
        %1202 = vmatprep.subr.mxu0 0.0
        %1203 = vmatpush2.msra.mxu0 0.0
        %1204 = vmatprep.mubr.f32.mxu0 0.0
        %1205 = vmatmul.mubr.f32.gmra.mxu0 %v1123
        %v1206 = vpop.f32.mrf.mxu0
        %v1207 = vadd.f32 0.0, %v1206
        %v1208 = vpop.f32.mrf.mxu0
        %1209 = vdwg.mxu0
        %1210 = vst [vmem:[%s525] sm:$0xff] %v1207
        %s1211 = sand.u32 %s286, 1
        %s1212 = scalar_lea.sflag [#allocation6], %s1211
        %s1213 = sand.u32 %s286, 1
        %s1214 = smul.addr %s1213, 8
        %s1215 = scalar_lea.vmem [#allocation15], %s1214
        // Predicated region
        $region89: #{tpu_custom_call.1} parent=59 // pred_check
          %p1216 = pneg %p296
        $region90: #{tpu_custom_call.1} parent=59 // pred_check_branch
          %1218 = sbr.rel (%p1216) target = $region92
        $region91: #{tpu_custom_call.1} parent=59 // pred_region
          %s1220 = ssub.s32 128, 128
          %1221 = vsyncadd %s1212, %s1220
          %s1222 = sadd.s32 %s37, %s36
          %s1223 = smul.addr %s1222, 128
          %s1224 = scalar_lea.hbm %s10, %s1223
          %s1226 = sshll.u32 %s1215, 4
          %s1227 = int_to_ptr.vmem [resolvable:$true] %s1226
          %1229 = dma.vmem_to_hbm [thread:$0]  %s1227, 128, %s1224, %s1212
        $region92: #{tpu_custom_call.1} parent=59 // pred_fallthru
          _
      $region60: #{tpu_custom_call.1} parent=5 // pred_fallthru
        _
      %p1230 = scmp.le.s32.totalorder 2, %s27
      // Predicated region
      $region93: #{tpu_custom_call.1} parent=5 // pred_check
        %p1231 = pneg %p1230
      $region94: #{tpu_custom_call.1} parent=5 // pred_check_branch
        %1233 = sbr.rel (%p1231) target = $region96
      $region95: #{tpu_custom_call.1} parent=5 // pred_region
        %s1234 = ssub.s32 %s27, 2
        // Predicated region
        $region97: #{tpu_custom_call.1} parent=95 // pred_check
          %p1235 = pneg %p302
        $region98: #{tpu_custom_call.1} parent=95 // pred_check_branch
          %1237 = sbr.rel (%p1235) target = $region100
        $region99: #{tpu_custom_call.1} parent=95 // pred_region
          %s1238 = sand.u32 %s287, 1
          %s1239 = scalar_lea.sflag [#allocation6], %s1238
          %s1240 = sand.u32 %s287, 1
          %s1241 = smul.addr %s1240, 8
          %s1242 = scalar_lea.vmem [#allocation15], %s1241
          %1243 = dma.done %s1239, 128
        $region100: #{tpu_custom_call.1} parent=95 // pred_fallthru
          _
      $region96: #{tpu_custom_call.1} parent=5 // pred_fallthru
        _
    $region6: #{tpu_custom_call.1} parent=1 // loop_footer
      %s31 = sadd.s32 1, %s27
    $region7: #{tpu_custom_call.1} parent=1 // loop_footer_branch
      %26 = sbr.rel target = $region3
    $region8: #{tpu_custom_call.1} parent=1 // loop_exit
      _
    %1244 = vsyncpa [#allocation5], 1
    %s1245 = scalar_lea.sflag [#allocation5], 1
    %1246 = vsyncpa %s1245, 1
    %1247 = vsyncpa [#allocation8], 1
    %s1248 = scalar_lea.sflag [#allocation8], 1
    %1249 = vsyncpa %s1248, 1
    %1250 = vsyncpa [#allocation11], 1
    %1251 = vsyncpa [#allocation14], 1
    %1252 = vsyncpa [#allocation6], 1
    %s1253 = scalar_lea.sflag [#allocation6], 1
    %1254 = vsyncpa %s1253, 1

</llo_original>
